<compile_context>
chip_gen: v7x
topology: tpu7x:2x2x1
jax: 0.10.0
libtpu: 0.0.40
codegen_flags: <defaults>
</compile_context>

<pallas_src>
import jax
import jax.numpy as jnp
import numpy as np
from jax.experimental import pallas as pl
from jax.experimental.pallas import tpu as pltpu

NEG_SLOPE = 0.01          # ILeakyReLU negative_slope
BN_EPS = 1e-5             # nn.BatchNorm3d default eps (bn_ieps only matters when invert=True)
VMEM_LIMIT = 32 * 1024 * 1024   # explicit scoped-VMEM budget (safe on v5e/v6e/v7x)


# --------------------------------------------------------------------------------------
# kernels
# --------------------------------------------------------------------------------------
def _make_conv_stats_kernel(H, W, C, apply_affine):
    """Per-slice: [optional BN-apply + LeakyReLU of previous block] -> 3x3 conv -> BN partials.

    apply_affine=False : pass A  (block1 conv on raw x)
    apply_affine=True  : pass B  (apply block1 BN/act, then block2 conv), fused in one pass.
    """
    WC = W * C
    WPC = (W + 2) * C

    def kernel(*refs):
        if apply_affine:
            (x_ref, scale_ref, shift_ref, band_ref, sel_ref,
             conv_ref, sum_ref, ssq_ref, xpad_ref) = refs
        else:
            (x_ref, band_ref, sel_ref,
             conv_ref, sum_ref, ssq_ref, xpad_ref) = refs

        t = x_ref[0]                                            # (H, W*C) f32
        if apply_affine:
            # previous block's BatchNorm (precomputed per-channel scale/shift, tiled over W)
            t = t * scale_ref[...] + shift_ref[...]
            t = jnp.where(t >= 0, t, NEG_SLOPE * t)             # LeakyReLU(0.01)

        # ---- in-kernel zero "same" padding: 1px halo in H and W (no host jnp.pad) ----
        xpad_ref[...] = jnp.zeros((H + 2, WPC), jnp.float32)
        xpad_ref[1:H + 1, C:C + WC] = t
        xp = xpad_ref[...]

        # ---- 3x3 conv as 3 banded matmuls (one per dy tap): K=(W+2)*C, N=W*C ----
        conv = jnp.zeros((H, WC), jnp.float32)
        for dy in range(3):
            conv = conv + jnp.dot(xp[dy:dy + H, :], band_ref[dy],
                                  preferred_element_type=jnp.float32)
        conv_ref[0] = conv                                      # lane-dense (H, W*C) store

        # ---- streaming BN partials: per-channel sum and sum-of-squares for this slice ----
        # sel (W*C, C) sums the W lane-groups back to channels (avoids lane-splitting reshapes)
        ch_sum = jnp.sum(jnp.dot(conv, sel_ref[...],
                                 preferred_element_type=jnp.float32),
                         axis=0, keepdims=True)                 # (1, C)
        ch_ssq = jnp.sum(jnp.dot(conv * conv, sel_ref[...],
                                 preferred_element_type=jnp.float32),
                         axis=0, keepdims=True)                 # (1, C)
        sum_ref[0] = ch_sum
        ssq_ref[0] = ch_ssq

    return kernel


def _apply_skip_kernel(conv_ref, scale_ref, shift_ref, x_ref, y_ref):
    """Pass C: block2 BN-apply + LeakyReLU + residual add, all elementwise, lane-dense."""
    a = conv_ref[0] * scale_ref[...] + shift_ref[...]
    a = jnp.where(a >= 0, a, NEG_SLOPE * a)
    y_ref[0] = a + x_ref[0]


# --------------------------------------------------------------------------------------
# pallas_call wrappers
# --------------------------------------------------------------------------------------
def _conv_block_call(x2, band, sel, C, scale=None, shift=None):
    """x2: (B, H, W*C) f32.  Returns (conv (B,H,W*C), sum (B,1,C), ssq (B,1,C))."""
    B, H, WC = x2.shape
    W = WC // C
    WPC = (W + 2) * C
    apply_affine = scale is not None

    args = [x2]
    in_specs = [pl.BlockSpec((1, H, WC), lambda b: (b, 0, 0))]
    if apply_affine:
        args += [scale, shift]
        in_specs += [pl.BlockSpec((1, WC), lambda b: (0, 0)),
                     pl.BlockSpec((1, WC), lambda b: (0, 0))]
    args += [band, sel]
    in_specs += [pl.BlockSpec((3, WPC, WC), lambda b: (0, 0, 0)),   # resident across grid
                 pl.BlockSpec((WC, C), lambda b: (0, 0))]           # resident across grid

    flops = 2 * B * H * WPC * WC * 3 + 4 * B * H * WC * C
    bytes_accessed = 4 * (2 * B * H * WC + 3 * WPC * WC + WC * C + 2 * B * C)

    conv, s, q = pl.pallas_call(
        _make_conv_stats_kernel(H, W, C, apply_affine),
        grid=(B,),
        in_specs=in_specs,
        out_specs=(pl.BlockSpec((1, H, WC), lambda b: (b, 0, 0)),
                   pl.BlockSpec((1, 1, C), lambda b: (b, 0, 0)),
                   pl.BlockSpec((1, 1, C), lambda b: (b, 0, 0))),
        out_shape=(jax.ShapeDtypeStruct((B, H, WC), jnp.float32),
                   jax.ShapeDtypeStruct((B, 1, C), jnp.float32),
                   jax.ShapeDtypeStruct((B, 1, C), jnp.float32)),
        scratch_shapes=[pltpu.VMEM((H + 2, WPC), jnp.float32)],     # halo-padded slice
        compiler_params=pltpu.CompilerParams(
            dimension_semantics=("parallel",),                      # stats are per-b partials
            vmem_limit_bytes=VMEM_LIMIT),
        cost_estimate=pl.CostEstimate(flops=flops, transcendentals=0,
                                      bytes_accessed=bytes_accessed),
    )(*args)
    return conv, s, q


def _apply_skip_call(conv2, scale, shift, x2):
    B, H, WC = conv2.shape
    return pl.pallas_call(
        _apply_skip_kernel,
        grid=(B,),
        in_specs=[pl.BlockSpec((1, H, WC), lambda b: (b, 0, 0)),
                  pl.BlockSpec((1, WC), lambda b: (0, 0)),
                  pl.BlockSpec((1, WC), lambda b: (0, 0)),
                  pl.BlockSpec((1, H, WC), lambda b: (b, 0, 0))],
        out_specs=pl.BlockSpec((1, H, WC), lambda b: (b, 0, 0)),
        out_shape=jax.ShapeDtypeStruct((B, H, WC), jnp.float32),
        compiler_params=pltpu.CompilerParams(
            dimension_semantics=("parallel",),
            vmem_limit_bytes=VMEM_LIMIT),
        cost_estimate=pl.CostEstimate(flops=4 * B * H * WC, transcendentals=0,
                                      bytes_accessed=4 * 3 * B * H * WC),
    )(conv2, scale, shift, x2)


# --------------------------------------------------------------------------------------
# host-side (tiny) helpers
# --------------------------------------------------------------------------------------
def _band_weights(w_hwio, W):
    """Pack HWIO (3,3,C,C) weights into per-dy block-banded matrices (3, (W+2)*C, W*C)."""
    C = w_hwio.shape[2]
    wx = jnp.arange(W + 2)[:, None]          # padded input column
    wc = jnp.arange(W)[None, :]              # output column
    masks = jnp.stack([(wx == wc + dx) for dx in range(3)],
                      axis=0).astype(w_hwio.dtype)               # (3, W+2, W)
    # band[dy, wx, cin, w, cout] = sum_dx [wx == w+dx] * w[dy, dx, cin, cout]
    band = jnp.einsum('axw,daio->dxiwo', masks, w_hwio)          # (3, W+2, C, W, C)
    return band.reshape(3, (W + 2) * C, W * C)


def _bn_affine(sum_out, ssq_out, gamma, beta, count, W):
    """Finalize streaming BN stats -> per-channel scale/shift, tiled over W for (1, W*C)."""
    ch_sum = jnp.sum(sum_out[:, 0, :], axis=0)                   # (C,)
    ch_ssq = jnp.sum(ssq_out[:, 0, :], axis=0)                   # (C,)
    mean = ch_sum / count
    var = ch_ssq / count - mean * mean                           # biased (training-mode) var
    scale = gamma * jax.lax.rsqrt(var + BN_EPS)
    shift = beta - mean * scale
    return (jnp.tile(scale, W).reshape(1, -1),
            jnp.tile(shift, W).reshape(1, -1))


@jax.jit
def iresidual_xd_forward(x_ncdhw, params):
    """IResidualXD(c, nblock=2, invert=False, skip_invert=False) forward."""
    N, C, D, H, W = x_ncdhw.shape
    # channels-last, depth folded into batch, W*C flattened onto the lane axis
    x2 = jnp.transpose(x_ncdhw, (0, 2, 3, 4, 1)).reshape(N * D, H, W * C)
    (w1, g1, b1), (w2, g2, b2) = params
    band1 = _band_weights(w1, W)
    band2 = _band_weights(w2, W)
    sel = jnp.tile(jnp.eye(C, dtype=jnp.float32), (W, 1))        # (W*C, C) lane->channel folder
    count = float(N * D * H * W)

    # pass A: conv1 + BN1 partial stats
    conv1, s1, q1 = _conv_block_call(x2, band1, sel, C)
    sc1, sh1 = _bn_affine(s1, q1, g1, b1, count, W)
    # pass B: apply BN1 + LeakyReLU (fused) -> conv2 + BN2 partial stats
    conv2, s2, q2 = _conv_block_call(conv1, band2, sel, C, sc1, sh1)
    sc2, sh2 = _bn_affine(s2, q2, g2, b2, count, W)
    # pass C: apply BN2 + LeakyReLU + residual add
    y2 = _apply_skip_call(conv2, sc2, sh2, x2)

    return jnp.transpose(y2.reshape(N, D, H, W, C), (0, 4, 1, 2, 3))


def init_params(key, C):
    """Deterministic synthetic parameters (PyTorch-style uniform fan-in bound)."""
    params = []
    bound = 1.0 / np.sqrt(C * 3 * 3)
    for _ in range(2):
        key, sub = jax.random.split(key)
        w = jax.random.uniform(sub, (3, 3, C, C), jnp.float32, -bound, bound)  # HWIO
        gamma = jnp.ones((C,), jnp.float32)    # bn_weight_init=1.0
        beta = jnp.zeros((C,), jnp.float32)    # default BN bias
        params.append((w, gamma, beta))
    return tuple(params)


# ----------------------------- pure-JAX reference -----------------------------
def _ref_block(x, w, gamma, beta):
    y = jax.lax.conv_general_dilated(
        x, w, window_strides=(1, 1), padding="SAME",
        dimension_numbers=("NHWC", "HWIO", "NHWC"))
    mean = y.mean(axis=(0, 1, 2))
    var = ((y - mean) ** 2).mean(axis=(0, 1, 2))
    y = (y - mean) / jnp.sqrt(var + BN_EPS) * gamma + beta
    return jnp.where(y >= 0, y, NEG_SLOPE * y)


def ref_forward(x_ncdhw, params):
    N, C, D, H, W = x_ncdhw.shape
    x = jnp.transpose(x_ncdhw, (0, 2, 3, 4, 1)).reshape(N * D, H, W, C)
    (w1, g1, b1), (w2, g2, b2) = params
    y = _ref_block(_ref_block(x, w1, g1, b1), w2, g2, b2) + x
    return jnp.transpose(y.reshape(N, D, H, W, C), (0, 4, 1, 2, 3))


if __name__ == "__main__":
    key = jax.random.PRNGKey(0)
    kx, kp = jax.random.split(key)
    N, C, D, H, W = 2, 4, 3, 16, 16          # NCDHW, matching nn.Conv3d input
    x = jax.random.normal(kx, (N, C, D, H, W), jnp.float32)
    params = init_params(kp, C)

    out = jax.block_until_ready(iresidual_xd_forward(x, params))
    ref = jax.block_until_ready(ref_forward(x, params))

    assert out.shape == x.shape
    np.testing.assert_allclose(np.asarray(out), np.asarray(ref), rtol=1e-4, atol=1e-4)
    print("KERNEL_OK")
</pallas_src>

<mosaic_0001>
module attributes {stable_mosaic.version = 11 : i64} {
  func.func @kernel(%arg0: i32, %arg1: memref<1x16x64xf32, #tpu.memory_space<vmem>>, %arg2: memref<3x72x64xf32, #tpu.memory_space<vmem>>, %arg3: memref<64x4xf32, #tpu.memory_space<vmem>>, %arg4: memref<1x16x64xf32, #tpu.memory_space<vmem>>, %arg5: memref<1x1x4xf32, #tpu.memory_space<vmem>>, %arg6: memref<1x1x4xf32, #tpu.memory_space<vmem>>, %arg7: memref<18x72xf32, #tpu.memory_space<vmem>>) attributes {dimension_semantics = [#tpu.dimension_semantics<parallel>], iteration_bounds = array<i64: 6>, scalar_prefetch = 0 : i64, scratch_operands = 1 : i64, tpu.core_type = #tpu.core_type<tc>, window_params = [{transform_indices = @transform_0, window_bounds = array<i64: 1, 16, 64>}, {pipeline_mode = #tpu.pipeline_mode<synchronous>, transform_indices = @transform_1, window_bounds = array<i64: 3, 72, 64>}, {pipeline_mode = #tpu.pipeline_mode<synchronous>, transform_indices = @transform_2, window_bounds = array<i64: 64, 4>}, {transform_indices = @transform_3, window_bounds = array<i64: 1, 16, 64>}, {transform_indices = @transform_4, window_bounds = array<i64: 1, 1, 4>}, {transform_indices = @transform_5, window_bounds = array<i64: 1, 1, 4>}]} {
    %c0 = arith.constant 0 : index
    %c0_0 = arith.constant 0 : index
    %c0_1 = arith.constant 0 : index
    %0 = vector.load %arg1[%c0, %c0_0, %c0_1] : memref<1x16x64xf32, #tpu.memory_space<vmem>>, vector<1x16x64xf32>
    %1 = vector.shape_cast %0 : vector<1x16x64xf32> to vector<16x64xf32>
    %cst = arith.constant 0.000000e+00 : f32
    %2 = vector.broadcast %cst : f32 to vector<18x72xf32>
    %c0_2 = arith.constant 0 : index
    %c0_3 = arith.constant 0 : index
    %3 = vector.load %arg7[%c0_2, %c0_3] : memref<18x72xf32, #tpu.memory_space<vmem>>, vector<18x72xf32>
    tpu.vector_store %arg7[%c0_2, %c0_3], %2 {strides = array<i32>} : memref<18x72xf32, #tpu.memory_space<vmem>>, vector<18x72xf32>,
    %c1 = arith.constant 1 : index
    %c4 = arith.constant 4 : index
    %4 = vector.load %arg7[%c1, %c4] : memref<18x72xf32, #tpu.memory_space<vmem>>, vector<16x64xf32>
    tpu.vector_store %arg7[%c1, %c4], %1 {strides = array<i32>} : memref<18x72xf32, #tpu.memory_space<vmem>>, vector<16x64xf32>,
    %c0_4 = arith.constant 0 : index
    %c0_5 = arith.constant 0 : index
    %5 = vector.load %arg7[%c0_4, %c0_5] : memref<18x72xf32, #tpu.memory_space<vmem>>, vector<18x72xf32>
    %cst_6 = arith.constant 0.000000e+00 : f32
    %6 = vector.broadcast %cst_6 : f32 to vector<16x64xf32>
    %7 = vector.extract_strided_slice %5 {offsets = [0, 0], sizes = [16, 72], strides = [1, 1]} : vector<18x72xf32> to vector<16x72xf32>
    %c0_7 = arith.constant 0 : index
    %c0_8 = arith.constant 0 : index
    %c0_9 = arith.constant 0 : index
    %8 = vector.load %arg2[%c0_7, %c0_8, %c0_9] : memref<3x72x64xf32, #tpu.memory_space<vmem>>, vector<1x72x64xf32>
    %9 = vector.shape_cast %8 : vector<1x72x64xf32> to vector<72x64xf32>
    %cst_10 = arith.constant dense<0.000000e+00> : vector<16x64xf32>
    %10 = tpu.matmul %7, %9, %cst_10 {dimension_numbers = #tpu.dot_dimension_numbers<[1], [0], [0], [1], [0, 0, 1, 1], [], []>} : vector<16x72xf32>, vector<72x64xf32>, vector<16x64xf32> -> vector<16x64xf32>
    %11 = arith.addf %6, %10 : vector<16x64xf32>
    %12 = vector.extract_strided_slice %5 {offsets = [1, 0], sizes = [16, 72], strides = [1, 1]} : vector<18x72xf32> to vector<16x72xf32>
    %c1_11 = arith.constant 1 : index
    %c0_12 = arith.constant 0 : index
    %c0_13 = arith.constant 0 : index
    %13 = vector.load %arg2[%c1_11, %c0_12, %c0_13] : memref<3x72x64xf32, #tpu.memory_space<vmem>>, vector<1x72x64xf32>
    %14 = vector.shape_cast %13 : vector<1x72x64xf32> to vector<72x64xf32>
    %cst_14 = arith.constant dense<0.000000e+00> : vector<16x64xf32>
    %15 = tpu.matmul %12, %14, %cst_14 {dimension_numbers = #tpu.dot_dimension_numbers<[1], [0], [0], [1], [0, 0, 1, 1], [], []>} : vector<16x72xf32>, vector<72x64xf32>, vector<16x64xf32> -> vector<16x64xf32>
    %16 = arith.addf %11, %15 : vector<16x64xf32>
    %17 = vector.extract_strided_slice %5 {offsets = [2, 0], sizes = [16, 72], strides = [1, 1]} : vector<18x72xf32> to vector<16x72xf32>
    %c2 = arith.constant 2 : index
    %c0_15 = arith.constant 0 : index
    %c0_16 = arith.constant 0 : index
    %18 = vector.load %arg2[%c2, %c0_15, %c0_16] : memref<3x72x64xf32, #tpu.memory_space<vmem>>, vector<1x72x64xf32>
    %19 = vector.shape_cast %18 : vector<1x72x64xf32> to vector<72x64xf32>
    %cst_17 = arith.constant dense<0.000000e+00> : vector<16x64xf32>
    %20 = tpu.matmul %17, %19, %cst_17 {dimension_numbers = #tpu.dot_dimension_numbers<[1], [0], [0], [1], [0, 0, 1, 1], [], []>} : vector<16x72xf32>, vector<72x64xf32>, vector<16x64xf32> -> vector<16x64xf32>
    %21 = arith.addf %16, %20 : vector<16x64xf32>
    %c0_18 = arith.constant 0 : index
    %c0_19 = arith.constant 0 : index
    %c0_20 = arith.constant 0 : index
    %22 = vector.load %arg4[%c0_18, %c0_19, %c0_20] : memref<1x16x64xf32, #tpu.memory_space<vmem>>, vector<1x16x64xf32>
    %23 = vector.shape_cast %22 : vector<1x16x64xf32> to vector<16x64xf32>
    %24 = vector.shape_cast %21 : vector<16x64xf32> to vector<1x16x64xf32>
    tpu.vector_store %arg4[%c0_18, %c0_19, %c0_20], %24 {strides = array<i32>} : memref<1x16x64xf32, #tpu.memory_space<vmem>>, vector<1x16x64xf32>,
    %c0_21 = arith.constant 0 : index
    %c0_22 = arith.constant 0 : index
    %25 = vector.load %arg3[%c0_21, %c0_22] : memref<64x4xf32, #tpu.memory_space<vmem>>, vector<64x4xf32>
    %cst_23 = arith.constant dense<0.000000e+00> : vector<16x4xf32>
    %26 = tpu.matmul %21, %25, %cst_23 {dimension_numbers = #tpu.dot_dimension_numbers<[1], [0], [0], [1], [0, 0, 1, 1], [], []>} : vector<16x64xf32>, vector<64x4xf32>, vector<16x4xf32> -> vector<16x4xf32>
    %cst_24 = arith.constant dense<0.000000e+00> : vector<4xf32>
    %27 = vector.multi_reduction <add>, %26, %cst_24 [0] : vector<16x4xf32> to vector<4xf32>
    %28 = vector.shape_cast %27 : vector<4xf32> to vector<1x4xf32>
    %29 = arith.mulf %21, %21 : vector<16x64xf32>
    %c0_25 = arith.constant 0 : index
    %c0_26 = arith.constant 0 : index
    %30 = vector.load %arg3[%c0_25, %c0_26] : memref<64x4xf32, #tpu.memory_space<vmem>>, vector<64x4xf32>
    %cst_27 = arith.constant dense<0.000000e+00> : vector<16x4xf32>
    %31 = tpu.matmul %29, %30, %cst_27 {dimension_numbers = #tpu.dot_dimension_numbers<[1], [0], [0], [1], [0, 0, 1, 1], [], []>} : vector<16x64xf32>, vector<64x4xf32>, vector<16x4xf32> -> vector<16x4xf32>
    %cst_28 = arith.constant dense<0.000000e+00> : vector<4xf32>
    %32 = vector.multi_reduction <add>, %31, %cst_28 [0] : vector<16x4xf32> to vector<4xf32>
    %33 = vector.shape_cast %32 : vector<4xf32> to vector<1x4xf32>
    %c0_29 = arith.constant 0 : index
    %c0_30 = arith.constant 0 : index
    %c0_31 = arith.constant 0 : index
    %34 = vector.load %arg5[%c0_29, %c0_30, %c0_31] : memref<1x1x4xf32, #tpu.memory_space<vmem>>, vector<1x1x4xf32>
    %35 = vector.shape_cast %34 : vector<1x1x4xf32> to vector<1x4xf32>
    %36 = vector.shape_cast %28 : vector<1x4xf32> to vector<1x1x4xf32>
    tpu.vector_store %arg5[%c0_29, %c0_30, %c0_31], %36 {strides = array<i32>} : memref<1x1x4xf32, #tpu.memory_space<vmem>>, vector<1x1x4xf32>,
    %c0_32 = arith.constant 0 : index
    %c0_33 = arith.constant 0 : index
    %c0_34 = arith.constant 0 : index
    %37 = vector.load %arg6[%c0_32, %c0_33, %c0_34] : memref<1x1x4xf32, #tpu.memory_space<vmem>>, vector<1x1x4xf32>
    %38 = vector.shape_cast %37 : vector<1x1x4xf32> to vector<1x4xf32>
    %39 = vector.shape_cast %33 : vector<1x4xf32> to vector<1x1x4xf32>
    tpu.vector_store %arg6[%c0_32, %c0_33, %c0_34], %39 {strides = array<i32>} : memref<1x1x4xf32, #tpu.memory_space<vmem>>, vector<1x1x4xf32>,
    return
  }
  func.func @transform_0(%arg0: i32) -> (i32, i32, i32) {
    %c0_i32 = arith.constant 0 : i32
    %c0_i32_0 = arith.constant 0 : i32
    %c0_i32_1 = arith.constant 0 : i32
    return %arg0, %c0_i32, %c0_i32_0 : i32, i32, i32
  }
  func.func @transform_1(%arg0: i32) -> (i32, i32, i32) {
    %c0_i32 = arith.constant 0 : i32
    %c0_i32_0 = arith.constant 0 : i32
    %c0_i32_1 = arith.constant 0 : i32
    %c0_i32_2 = arith.constant 0 : i32
    return %c0_i32, %c0_i32_0, %c0_i32_1 : i32, i32, i32
  }
  func.func @transform_2(%arg0: i32) -> (i32, i32) {
    %c0_i32 = arith.constant 0 : i32
    %c0_i32_0 = arith.constant 0 : i32
    %c0_i32_1 = arith.constant 0 : i32
    return %c0_i32, %c0_i32_0 : i32, i32
  }
  func.func @transform_3(%arg0: i32) -> (i32, i32, i32) {
    %c0_i32 = arith.constant 0 : i32
    %c0_i32_0 = arith.constant 0 : i32
    %c0_i32_1 = arith.constant 0 : i32
    return %arg0, %c0_i32, %c0_i32_0 : i32, i32, i32
  }
  func.func @transform_4(%arg0: i32) -> (i32, i32, i32) {
    %c0_i32 = arith.constant 0 : i32
    %c0_i32_0 = arith.constant 0 : i32
    %c0_i32_1 = arith.constant 0 : i32
    return %arg0, %c0_i32, %c0_i32_0 : i32, i32, i32
  }
  func.func @transform_5(%arg0: i32) -> (i32, i32, i32) {
    %c0_i32 = arith.constant 0 : i32
    %c0_i32_0 = arith.constant 0 : i32
    %c0_i32_1 = arith.constant 0 : i32
    return %arg0, %c0_i32, %c0_i32_0 : i32, i32, i32
  }
}

module attributes {stable_mosaic.version = 11 : i64} {
  func.func @kernel(%arg0: i32, %arg1: memref<1x16x64xf32, #tpu.memory_space<vmem>>, %arg2: memref<1x64xf32, #tpu.memory_space<vmem>>, %arg3: memref<1x64xf32, #tpu.memory_space<vmem>>, %arg4: memref<3x72x64xf32, #tpu.memory_space<vmem>>, %arg5: memref<64x4xf32, #tpu.memory_space<vmem>>, %arg6: memref<1x16x64xf32, #tpu.memory_space<vmem>>, %arg7: memref<1x1x4xf32, #tpu.memory_space<vmem>>, %arg8: memref<1x1x4xf32, #tpu.memory_space<vmem>>, %arg9: memref<18x72xf32, #tpu.memory_space<vmem>>) attributes {dimension_semantics = [#tpu.dimension_semantics<parallel>], iteration_bounds = array<i64: 6>, scalar_prefetch = 0 : i64, scratch_operands = 1 : i64, tpu.core_type = #tpu.core_type<tc>, window_params = [{transform_indices = @transform_0, window_bounds = array<i64: 1, 16, 64>}, {pipeline_mode = #tpu.pipeline_mode<synchronous>, transform_indices = @transform_1, window_bounds = array<i64: 1, 64>}, {pipeline_mode = #tpu.pipeline_mode<synchronous>, transform_indices = @transform_2, window_bounds = array<i64: 1, 64>}, {pipeline_mode = #tpu.pipeline_mode<synchronous>, transform_indices = @transform_3, window_bounds = array<i64: 3, 72, 64>}, {pipeline_mode = #tpu.pipeline_mode<synchronous>, transform_indices = @transform_4, window_bounds = array<i64: 64, 4>}, {transform_indices = @transform_5, window_bounds = array<i64: 1, 16, 64>}, {transform_indices = @transform_6, window_bounds = array<i64: 1, 1, 4>}, {transform_indices = @transform_7, window_bounds = array<i64: 1, 1, 4>}]} {
    %c0 = arith.constant 0 : index
    %c0_0 = arith.constant 0 : index
    %c0_1 = arith.constant 0 : index
    %0 = vector.load %arg1[%c0, %c0_0, %c0_1] : memref<1x16x64xf32, #tpu.memory_space<vmem>>, vector<1x16x64xf32>
    %1 = vector.shape_cast %0 : vector<1x16x64xf32> to vector<16x64xf32>
    %c0_2 = arith.constant 0 : index
    %c0_3 = arith.constant 0 : index
    %2 = vector.load %arg2[%c0_2, %c0_3] : memref<1x64xf32, #tpu.memory_space<vmem>>, vector<1x64xf32>
    %3 = vector.broadcast %2 : vector<1x64xf32> to vector<16x64xf32>
    %4 = arith.mulf %1, %3 : vector<16x64xf32>
    %c0_4 = arith.constant 0 : index
    %c0_5 = arith.constant 0 : index
    %5 = vector.load %arg3[%c0_4, %c0_5] : memref<1x64xf32, #tpu.memory_space<vmem>>, vector<1x64xf32>
    %6 = vector.broadcast %5 : vector<1x64xf32> to vector<16x64xf32>
    %7 = arith.addf %4, %6 : vector<16x64xf32>
    %cst = arith.constant 0.000000e+00 : f32
    %8 = vector.broadcast %cst : f32 to vector<16x64xf32>
    %9 = arith.cmpf oge, %7, %8 : vector<16x64xf32>
    %cst_6 = arith.constant 0.00999999977 : f32
    %10 = vector.broadcast %cst_6 : f32 to vector<16x64xf32>
    %11 = arith.mulf %10, %7 : vector<16x64xf32>
    %12 = arith.select %9, %7, %11 : vector<16x64xi1>, vector<16x64xf32>
    %cst_7 = arith.constant 0.000000e+00 : f32
    %13 = vector.broadcast %cst_7 : f32 to vector<18x72xf32>
    %c0_8 = arith.constant 0 : index
    %c0_9 = arith.constant 0 : index
    %14 = vector.load %arg9[%c0_8, %c0_9] : memref<18x72xf32, #tpu.memory_space<vmem>>, vector<18x72xf32>
    tpu.vector_store %arg9[%c0_8, %c0_9], %13 {strides = array<i32>} : memref<18x72xf32, #tpu.memory_space<vmem>>, vector<18x72xf32>,
    %c1 = arith.constant 1 : index
    %c4 = arith.constant 4 : index
    %15 = vector.load %arg9[%c1, %c4] : memref<18x72xf32, #tpu.memory_space<vmem>>, vector<16x64xf32>
    tpu.vector_store %arg9[%c1, %c4], %12 {strides = array<i32>} : memref<18x72xf32, #tpu.memory_space<vmem>>, vector<16x64xf32>,
    %c0_10 = arith.constant 0 : index
    %c0_11 = arith.constant 0 : index
    %16 = vector.load %arg9[%c0_10, %c0_11] : memref<18x72xf32, #tpu.memory_space<vmem>>, vector<18x72xf32>
    %cst_12 = arith.constant 0.000000e+00 : f32
    %17 = vector.broadcast %cst_12 : f32 to vector<16x64xf32>
    %18 = vector.extract_strided_slice %16 {offsets = [0, 0], sizes = [16, 72], strides = [1, 1]} : vector<18x72xf32> to vector<16x72xf32>
    %c0_13 = arith.constant 0 : index
    %c0_14 = arith.constant 0 : index
    %c0_15 = arith.constant 0 : index
    %19 = vector.load %arg4[%c0_13, %c0_14, %c0_15] : memref<3x72x64xf32, #tpu.memory_space<vmem>>, vector<1x72x64xf32>
    %20 = vector.shape_cast %19 : vector<1x72x64xf32> to vector<72x64xf32>
    %cst_16 = arith.constant dense<0.000000e+00> : vector<16x64xf32>
    %21 = tpu.matmul %18, %20, %cst_16 {dimension_numbers = #tpu.dot_dimension_numbers<[1], [0], [0], [1], [0, 0, 1, 1], [], []>} : vector<16x72xf32>, vector<72x64xf32>, vector<16x64xf32> -> vector<16x64xf32>
    %22 = arith.addf %17, %21 : vector<16x64xf32>
    %23 = vector.extract_strided_slice %16 {offsets = [1, 0], sizes = [16, 72], strides = [1, 1]} : vector<18x72xf32> to vector<16x72xf32>
    %c1_17 = arith.constant 1 : index
    %c0_18 = arith.constant 0 : index
    %c0_19 = arith.constant 0 : index
    %24 = vector.load %arg4[%c1_17, %c0_18, %c0_19] : memref<3x72x64xf32, #tpu.memory_space<vmem>>, vector<1x72x64xf32>
    %25 = vector.shape_cast %24 : vector<1x72x64xf32> to vector<72x64xf32>
    %cst_20 = arith.constant dense<0.000000e+00> : vector<16x64xf32>
    %26 = tpu.matmul %23, %25, %cst_20 {dimension_numbers = #tpu.dot_dimension_numbers<[1], [0], [0], [1], [0, 0, 1, 1], [], []>} : vector<16x72xf32>, vector<72x64xf32>, vector<16x64xf32> -> vector<16x64xf32>
    %27 = arith.addf %22, %26 : vector<16x64xf32>
    %28 = vector.extract_strided_slice %16 {offsets = [2, 0], sizes = [16, 72], strides = [1, 1]} : vector<18x72xf32> to vector<16x72xf32>
    %c2 = arith.constant 2 : index
    %c0_21 = arith.constant 0 : index
    %c0_22 = arith.constant 0 : index
    %29 = vector.load %arg4[%c2, %c0_21, %c0_22] : memref<3x72x64xf32, #tpu.memory_space<vmem>>, vector<1x72x64xf32>
    %30 = vector.shape_cast %29 : vector<1x72x64xf32> to vector<72x64xf32>
    %cst_23 = arith.constant dense<0.000000e+00> : vector<16x64xf32>
    %31 = tpu.matmul %28, %30, %cst_23 {dimension_numbers = #tpu.dot_dimension_numbers<[1], [0], [0], [1], [0, 0, 1, 1], [], []>} : vector<16x72xf32>, vector<72x64xf32>, vector<16x64xf32> -> vector<16x64xf32>
    %32 = arith.addf %27, %31 : vector<16x64xf32>
    %c0_24 = arith.constant 0 : index
    %c0_25 = arith.constant 0 : index
    %c0_26 = arith.constant 0 : index
    %33 = vector.load %arg6[%c0_24, %c0_25, %c0_26] : memref<1x16x64xf32, #tpu.memory_space<vmem>>, vector<1x16x64xf32>
    %34 = vector.shape_cast %33 : vector<1x16x64xf32> to vector<16x64xf32>
    %35 = vector.shape_cast %32 : vector<16x64xf32> to vector<1x16x64xf32>
    tpu.vector_store %arg6[%c0_24, %c0_25, %c0_26], %35 {strides = array<i32>} : memref<1x16x64xf32, #tpu.memory_space<vmem>>, vector<1x16x64xf32>,
    %c0_27 = arith.constant 0 : index
    %c0_28 = arith.constant 0 : index
    %36 = vector.load %arg5[%c0_27, %c0_28] : memref<64x4xf32, #tpu.memory_space<vmem>>, vector<64x4xf32>
    %cst_29 = arith.constant dense<0.000000e+00> : vector<16x4xf32>
    %37 = tpu.matmul %32, %36, %cst_29 {dimension_numbers = #tpu.dot_dimension_numbers<[1], [0], [0], [1], [0, 0, 1, 1], [], []>} : vector<16x64xf32>, vector<64x4xf32>, vector<16x4xf32> -> vector<16x4xf32>
    %cst_30 = arith.constant dense<0.000000e+00> : vector<4xf32>
    %38 = vector.multi_reduction <add>, %37, %cst_30 [0] : vector<16x4xf32> to vector<4xf32>
    %39 = vector.shape_cast %38 : vector<4xf32> to vector<1x4xf32>
    %40 = arith.mulf %32, %32 : vector<16x64xf32>
    %c0_31 = arith.constant 0 : index
    %c0_32 = arith.constant 0 : index
    %41 = vector.load %arg5[%c0_31, %c0_32] : memref<64x4xf32, #tpu.memory_space<vmem>>, vector<64x4xf32>
    %cst_33 = arith.constant dense<0.000000e+00> : vector<16x4xf32>
    %42 = tpu.matmul %40, %41, %cst_33 {dimension_numbers = #tpu.dot_dimension_numbers<[1], [0], [0], [1], [0, 0, 1, 1], [], []>} : vector<16x64xf32>, vector<64x4xf32>, vector<16x4xf32> -> vector<16x4xf32>
    %cst_34 = arith.constant dense<0.000000e+00> : vector<4xf32>
    %43 = vector.multi_reduction <add>, %42, %cst_34 [0] : vector<16x4xf32> to vector<4xf32>
    %44 = vector.shape_cast %43 : vector<4xf32> to vector<1x4xf32>
    %c0_35 = arith.constant 0 : index
    %c0_36 = arith.constant 0 : index
    %c0_37 = arith.constant 0 : index
    %45 = vector.load %arg7[%c0_35, %c0_36, %c0_37] : memref<1x1x4xf32, #tpu.memory_space<vmem>>, vector<1x1x4xf32>
    %46 = vector.shape_cast %45 : vector<1x1x4xf32> to vector<1x4xf32>
    %47 = vector.shape_cast %39 : vector<1x4xf32> to vector<1x1x4xf32>
    tpu.vector_store %arg7[%c0_35, %c0_36, %c0_37], %47 {strides = array<i32>} : memref<1x1x4xf32, #tpu.memory_space<vmem>>, vector<1x1x4xf32>,
    %c0_38 = arith.constant 0 : index
    %c0_39 = arith.constant 0 : index
    %c0_40 = arith.constant 0 : index
    %48 = vector.load %arg8[%c0_38, %c0_39, %c0_40] : memref<1x1x4xf32, #tpu.memory_space<vmem>>, vector<1x1x4xf32>
    %49 = vector.shape_cast %48 : vector<1x1x4xf32> to vector<1x4xf32>
    %50 = vector.shape_cast %44 : vector<1x4xf32> to vector<1x1x4xf32>
    tpu.vector_store %arg8[%c0_38, %c0_39, %c0_40], %50 {strides = array<i32>} : memref<1x1x4xf32, #tpu.memory_space<vmem>>, vector<1x1x4xf32>,
    return
  }
  func.func @transform_0(%arg0: i32) -> (i32, i32, i32) {
    %c0_i32 = arith.constant 0 : i32
    %c0_i32_0 = arith.constant 0 : i32
    %c0_i32_1 = arith.constant 0 : i32
    return %arg0, %c0_i32, %c0_i32_0 : i32, i32, i32
  }
  func.func @transform_1(%arg0: i32) -> (i32, i32) {
    %c0_i32 = arith.constant 0 : i32
    %c0_i32_0 = arith.constant 0 : i32
    %c0_i32_1 = arith.constant 0 : i32
    return %c0_i32, %c0_i32_0 : i32, i32
  }
  func.func @transform_2(%arg0: i32) -> (i32, i32) {
    %c0_i32 = arith.constant 0 : i32
    %c0_i32_0 = arith.constant 0 : i32
    %c0_i32_1 = arith.constant 0 : i32
    return %c0_i32, %c0_i32_0 : i32, i32
  }
  func.func @transform_3(%arg0: i32) -> (i32, i32, i32) {
    %c0_i32 = arith.constant 0 : i32
    %c0_i32_0 = arith.constant 0 : i32
    %c0_i32_1 = arith.constant 0 : i32
    %c0_i32_2 = arith.constant 0 : i32
    return %c0_i32, %c0_i32_0, %c0_i32_1 : i32, i32, i32
  }
  func.func @transform_4(%arg0: i32) -> (i32, i32) {
    %c0_i32 = arith.constant 0 : i32
    %c0_i32_0 = arith.constant 0 : i32
    %c0_i32_1 = arith.constant 0 : i32
    return %c0_i32, %c0_i32_0 : i32, i32
  }
  func.func @transform_5(%arg0: i32) -> (i32, i32, i32) {
    %c0_i32 = arith.constant 0 : i32
    %c0_i32_0 = arith.constant 0 : i32
    %c0_i32_1 = arith.constant 0 : i32
    return %arg0, %c0_i32, %c0_i32_0 : i32, i32, i32
  }
  func.func @transform_6(%arg0: i32) -> (i32, i32, i32) {
    %c0_i32 = arith.constant 0 : i32
    %c0_i32_0 = arith.constant 0 : i32
    %c0_i32_1 = arith.constant 0 : i32
    return %arg0, %c0_i32, %c0_i32_0 : i32, i32, i32
  }
  func.func @transform_7(%arg0: i32) -> (i32, i32, i32) {
    %c0_i32 = arith.constant 0 : i32
    %c0_i32_0 = arith.constant 0 : i32
    %c0_i32_1 = arith.constant 0 : i32
    return %arg0, %c0_i32, %c0_i32_0 : i32, i32, i32
  }
}

module attributes {stable_mosaic.version = 11 : i64} {
  func.func @_apply_skip_kernel(%arg0: i32, %arg1: memref<1x16x64xf32, #tpu.memory_space<vmem>>, %arg2: memref<1x64xf32, #tpu.memory_space<vmem>>, %arg3: memref<1x64xf32, #tpu.memory_space<vmem>>, %arg4: memref<1x16x64xf32, #tpu.memory_space<vmem>>, %arg5: memref<1x16x64xf32, #tpu.memory_space<vmem>>) attributes {dimension_semantics = [#tpu.dimension_semantics<parallel>], iteration_bounds = array<i64: 6>, scalar_prefetch = 0 : i64, scratch_operands = 0 : i64, tpu.core_type = #tpu.core_type<tc>, window_params = [{transform_indices = @transform_0, window_bounds = array<i64: 1, 16, 64>}, {pipeline_mode = #tpu.pipeline_mode<synchronous>, transform_indices = @transform_1, window_bounds = array<i64: 1, 64>}, {pipeline_mode = #tpu.pipeline_mode<synchronous>, transform_indices = @transform_2, window_bounds = array<i64: 1, 64>}, {transform_indices = @transform_3, window_bounds = array<i64: 1, 16, 64>}, {transform_indices = @transform_4, window_bounds = array<i64: 1, 16, 64>}]} {
    %c0 = arith.constant 0 : index
    %c0_0 = arith.constant 0 : index
    %c0_1 = arith.constant 0 : index
    %0 = vector.load %arg1[%c0, %c0_0, %c0_1] : memref<1x16x64xf32, #tpu.memory_space<vmem>>, vector<1x16x64xf32>
    %1 = vector.shape_cast %0 : vector<1x16x64xf32> to vector<16x64xf32>
    %c0_2 = arith.constant 0 : index
    %c0_3 = arith.constant 0 : index
    %2 = vector.load %arg2[%c0_2, %c0_3] : memref<1x64xf32, #tpu.memory_space<vmem>>, vector<1x64xf32>
    %3 = vector.broadcast %2 : vector<1x64xf32> to vector<16x64xf32>
    %4 = arith.mulf %1, %3 : vector<16x64xf32>
    %c0_4 = arith.constant 0 : index
    %c0_5 = arith.constant 0 : index
    %5 = vector.load %arg3[%c0_4, %c0_5] : memref<1x64xf32, #tpu.memory_space<vmem>>, vector<1x64xf32>
    %6 = vector.broadcast %5 : vector<1x64xf32> to vector<16x64xf32>
    %7 = arith.addf %4, %6 : vector<16x64xf32>
    %cst = arith.constant 0.000000e+00 : f32
    %8 = vector.broadcast %cst : f32 to vector<16x64xf32>
    %9 = arith.cmpf oge, %7, %8 : vector<16x64xf32>
    %cst_6 = arith.constant 0.00999999977 : f32
    %10 = vector.broadcast %cst_6 : f32 to vector<16x64xf32>
    %11 = arith.mulf %10, %7 : vector<16x64xf32>
    %12 = arith.select %9, %7, %11 : vector<16x64xi1>, vector<16x64xf32>
    %c0_7 = arith.constant 0 : index
    %c0_8 = arith.constant 0 : index
    %c0_9 = arith.constant 0 : index
    %13 = vector.load %arg4[%c0_7, %c0_8, %c0_9] : memref<1x16x64xf32, #tpu.memory_space<vmem>>, vector<1x16x64xf32>
    %14 = vector.shape_cast %13 : vector<1x16x64xf32> to vector<16x64xf32>
    %15 = arith.addf %12, %14 : vector<16x64xf32>
    %c0_10 = arith.constant 0 : index
    %c0_11 = arith.constant 0 : index
    %c0_12 = arith.constant 0 : index
    %16 = vector.load %arg5[%c0_10, %c0_11, %c0_12] : memref<1x16x64xf32, #tpu.memory_space<vmem>>, vector<1x16x64xf32>
    %17 = vector.shape_cast %16 : vector<1x16x64xf32> to vector<16x64xf32>
    %18 = vector.shape_cast %15 : vector<16x64xf32> to vector<1x16x64xf32>
    tpu.vector_store %arg5[%c0_10, %c0_11, %c0_12], %18 {strides = array<i32>} : memref<1x16x64xf32, #tpu.memory_space<vmem>>, vector<1x16x64xf32>,
    return
  }
  func.func @transform_0(%arg0: i32) -> (i32, i32, i32) {
    %c0_i32 = arith.constant 0 : i32
    %c0_i32_0 = arith.constant 0 : i32
    %c0_i32_1 = arith.constant 0 : i32
    return %arg0, %c0_i32, %c0_i32_0 : i32, i32, i32
  }
  func.func @transform_1(%arg0: i32) -> (i32, i32) {
    %c0_i32 = arith.constant 0 : i32
    %c0_i32_0 = arith.constant 0 : i32
    %c0_i32_1 = arith.constant 0 : i32
    return %c0_i32, %c0_i32_0 : i32, i32
  }
  func.func @transform_2(%arg0: i32) -> (i32, i32) {
    %c0_i32 = arith.constant 0 : i32
    %c0_i32_0 = arith.constant 0 : i32
    %c0_i32_1 = arith.constant 0 : i32
    return %c0_i32, %c0_i32_0 : i32, i32
  }
  func.func @transform_3(%arg0: i32) -> (i32, i32, i32) {
    %c0_i32 = arith.constant 0 : i32
    %c0_i32_0 = arith.constant 0 : i32
    %c0_i32_1 = arith.constant 0 : i32
    return %arg0, %c0_i32, %c0_i32_0 : i32, i32, i32
  }
  func.func @transform_4(%arg0: i32) -> (i32, i32, i32) {
    %c0_i32 = arith.constant 0 : i32
    %c0_i32_0 = arith.constant 0 : i32
    %c0_i32_1 = arith.constant 0 : i32
    return %arg0, %c0_i32, %c0_i32_0 : i32, i32, i32
  }
}

</mosaic_0001>

<llo_original>
// kernel: tile.33
$region0: #{tile.33}
  #allocation0 [shape = 's32[1]{0}', space=sflag, size = 0x4, scoped, tag = 'scoped memory for tile.33']
  %s0 = inlined_call_operand.vmem [shape: f32[4], index: 0, kind: input, shape index: {}]
  %s1 = inlined_call_operand.vmem [shape: f32[16,4], index: 1, kind: output, shape index: {}]
  // Predicated region
  $region2: #{tile.33} parent=0 // pred_check
    _
  $region3: #{tile.33} parent=0 // pred_check_branch
    %3 = sbr.rel (0) target = $region5
  $region4: #{tile.33} parent=0 // pred_region
    _
  $region5: #{tile.33} parent=0 // pred_fallthru
    _
  %v4 = vld [vmem:[%s0] ss:$0 sm:$0xff]
  %5 = vst [vmem:[%s1] sm:$0xff] %v4
  %s6 = scalar_lea.vmem %s1, 8
  %7 = vst [vmem:[%s6] sm:$0xff] %v4

// kernel: tile.34
$region0: #{tile.34}
  %s0 = inlined_call_operand.vmem [shape: f32[16,4], index: 0, kind: input, shape index: {}]
  %s1 = inlined_call_operand.vmem [shape: f32[1,64], index: 1, kind: output, shape index: {}]
  $region1: #{tile.34} parent=0
    #allocation0 [shape = 'u8[4096]{0}', space=vmem, size = 0x1000, scoped, tag = 'scoped mem for output reshape']
    %v2 = vld [vmem:[%s0] sm:$0x1]
    %vm3 = vcmask 31744
    %4 = vst.msk [vmem:[#allocation0] sm:$0x1] %vm3, %v2
    %s5 = scalar_lea.vmem %s0, 15
    %v6 = vld [vmem:[%s5] sm:$0x1]
    %7 = vrot.lane.b32.xlu0 %v6, 60
    %v8 = vpop.permute.xlu0 %7
    %vm9 = vcmask 523744
    %10 = vst.msk [vmem:[#allocation0] sm:$0x1] %vm9, %v8
    %s11 = scalar_lea.vmem %s0, 14
    %v12 = vld [vmem:[%s11] sm:$0x1]
    %13 = vrot.lane.b32.xlu0 %v12, 56
    %v14 = vpop.permute.xlu0 %13
    %vm15 = vcmask 490944
    %16 = vst.msk [vmem:[#allocation0] sm:$0x1] %vm15, %v14
    %s17 = scalar_lea.vmem %s0, 13
    %v18 = vld [vmem:[%s17] sm:$0x1]
    %19 = vrot.lane.b32.xlu0 %v18, 52
    %v20 = vpop.permute.xlu0 %19
    %vm21 = vcmask 458144
    %22 = vst.msk [vmem:[#allocation0] sm:$0x1] %vm21, %v20
    %s23 = scalar_lea.vmem %s0, 12
    %v24 = vld [vmem:[%s23] sm:$0x1]
    %25 = vrot.lane.b32.xlu0 %v24, 48
    %v26 = vpop.permute.xlu0 %25
    %vm27 = vcmask 425344
    %28 = vst.msk [vmem:[#allocation0] sm:$0x1] %vm27, %v26
    %s29 = scalar_lea.vmem %s0, 11
    %v30 = vld [vmem:[%s29] sm:$0x1]
    %31 = vrot.lane.b32.xlu0 %v30, 44
    %v32 = vpop.permute.xlu0 %31
    %vm33 = vcmask 392544
    %34 = vst.msk [vmem:[#allocation0] sm:$0x1] %vm33, %v32
    %s35 = scalar_lea.vmem %s0, 10
    %v36 = vld [vmem:[%s35] sm:$0x1]
    %37 = vrot.lane.b32.xlu0 %v36, 40
    %v38 = vpop.permute.xlu0 %37
    %vm39 = vcmask 359744
    %40 = vst.msk [vmem:[#allocation0] sm:$0x1] %vm39, %v38
    %s41 = scalar_lea.vmem %s0, 9
    %v42 = vld [vmem:[%s41] sm:$0x1]
    %43 = vrot.lane.b32.xlu0 %v42, 36
    %v44 = vpop.permute.xlu0 %43
    %vm45 = vcmask 326944
    %46 = vst.msk [vmem:[#allocation0] sm:$0x1] %vm45, %v44
    %s47 = scalar_lea.vmem %s0, 8
    %v48 = vld [vmem:[%s47] sm:$0x1]
    %49 = vrot.lane.b32.xlu0 %v48, 32
    %v50 = vpop.permute.xlu0 %49
    %vm51 = vcmask 294144
    %52 = vst.msk [vmem:[#allocation0] sm:$0x1] %vm51, %v50
    %s53 = scalar_lea.vmem %s0, 7
    %v54 = vld [vmem:[%s53] sm:$0x1]
    %55 = vrot.lane.b32.xlu0 %v54, 28
    %v56 = vpop.permute.xlu0 %55
    %vm57 = vcmask 261344
    %58 = vst.msk [vmem:[#allocation0] sm:$0x1] %vm57, %v56
    %s59 = scalar_lea.vmem %s0, 6
    %v60 = vld [vmem:[%s59] sm:$0x1]
    %61 = vrot.lane.b32.xlu0 %v60, 24
    %v62 = vpop.permute.xlu0 %61
    %vm63 = vcmask 228544
    %64 = vst.msk [vmem:[#allocation0] sm:$0x1] %vm63, %v62
    %s65 = scalar_lea.vmem %s0, 5
    %v66 = vld [vmem:[%s65] sm:$0x1]
    %67 = vrot.lane.b32.xlu0 %v66, 20
    %v68 = vpop.permute.xlu0 %67
    %vm69 = vcmask 195744
    %70 = vst.msk [vmem:[#allocation0] sm:$0x1] %vm69, %v68
    %s71 = scalar_lea.vmem %s0, 4
    %v72 = vld [vmem:[%s71] sm:$0x1]
    %73 = vrot.lane.b32.xlu0 %v72, 16
    %v74 = vpop.permute.xlu0 %73
    %vm75 = vcmask 162944
    %76 = vst.msk [vmem:[#allocation0] sm:$0x1] %vm75, %v74
    %s77 = scalar_lea.vmem %s0, 3
    %v78 = vld [vmem:[%s77] sm:$0x1]
    %79 = vrot.lane.b32.xlu0 %v78, 12
    %v80 = vpop.permute.xlu0 %79
    %vm81 = vcmask 130144
    %82 = vst.msk [vmem:[#allocation0] sm:$0x1] %vm81, %v80
    %s83 = scalar_lea.vmem %s0, 2
    %v84 = vld [vmem:[%s83] sm:$0x1]
    %85 = vrot.lane.b32.xlu0 %v84, 8
    %v86 = vpop.permute.xlu0 %85
    %vm87 = vcmask 97344
    %88 = vst.msk [vmem:[#allocation0] sm:$0x1] %vm87, %v86
    %s89 = scalar_lea.vmem %s0, 1
    %v90 = vld [vmem:[%s89] sm:$0x1]
    %91 = vrot.lane.b32.xlu0 %v90, 4
    %v92 = vpop.permute.xlu0 %91
    %vm93 = vcmask 64544
    %94 = vst.msk [vmem:[#allocation0] sm:$0x1] %vm93, %v92
    %s96 = sshllo.u32 0, 1
    %v98 = vld [vmem:[#allocation0] sm:%s96]
    %s99 = sshllo.u32 0, 1
    %100 = vst [vmem:[%s1] sm:%s99] %v98

// kernel: iresidual_xd_forward.3
$region0: #{iresidual_xd_forward.3}
  #allocation0 [shape = 'u32[]', space=smem, size = 0x4, offset = 0x4, fixed_abs, tag = 'smem constant byte address 0x4 - core index']
  #allocation1 [shape = 'u32[144,128]{1,0:T(1,128)}', space=vmem, size = 0x12000, scoped, tag = 'internal scratch']
  #allocation2 [shape = 'f32[18,72]{1,0:T(8,128)}', space=vmem, size = 0x3000, scoped, tag = 'scratch operand']
  %s0 = inlined_call_operand.vmem [shape: f32[6,16,64], index: 0, kind: input, shape index: {}]
  %s1 = inlined_call_operand.vmem [shape: f32[3,72,64], index: 1, kind: input, shape index: {}]
  %s2 = inlined_call_operand.vmem [shape: f32[64,4], index: 2, kind: input, shape index: {}]
  %s3 = inlined_call_operand.vmem [shape: f32[6,16,64], index: 3, kind: output, shape index: {0}]
  %s4 = inlined_call_operand.vmem [shape: f32[6,1,4], index: 4, kind: output, shape index: {1}]
  %s5 = inlined_call_operand.vmem [shape: f32[6,1,4], index: 5, kind: output, shape index: {2}]
  %6 = xla_tuple %s3, %s4, %s5
  %s7 = sld [smem:[#allocation0]]
  $region61: #{iresidual_xd_forward.3} parent=0
    _
  %s9 = ssub.s32 1, %s7
  %s10 = scalar_select 0, %s9, %s7
  loop: start=0, step=1, limit=8
  $region2: #{iresidual_xd_forward.3} parent=0 // loop_pre_header
    _
  $region3: #{iresidual_xd_forward.3} parent=0 // loop_header
    %s12 = sphi 0, %s16
    %p13 = scmp.ge.s32.totalorder %s12, 8
    %s22 = sphi 0, %s24
    %s25 = sphi 0, %s22
    %s26 = sphi 0, %s25
    %s42 = sphi 0, %s26
    %s46 = sphi 0, %s46
    %s48 = sphi 0, %s46
    %s49 = sphi 0, %s48
    %s63 = sphi 0, %s49
    %s67 = sphi 0, %s67
    %s69 = sphi 0, %s67
    %s70 = sphi 0, %s69
    %s84 = sphi 0, %s70
    %s90 = sphi 0, %s92
    %s93 = sphi 0, %s90
    %s94 = sphi 0, %s93
    %s110 = sphi 0, %s94
    %s116 = sphi 0, %s118
    %s119 = sphi 0, %s116
    %s120 = sphi 0, %s119
    %s136 = sphi 0, %s120
    %s142 = sphi 0, %s144
    %s145 = sphi 0, %s142
    %s146 = sphi 0, %s145
    %s162 = sphi 0, %s146
  $region4: #{iresidual_xd_forward.3} parent=0 // loop_header_branch
    %15 = sbr.rel (%p13) target = $region8
  $region5: #{iresidual_xd_forward.3} parent=0 // loop_body
    %s17 = ssub.s32 %s12, 1
    %s18 = ssub.s32 %s12, 2
    %s19 = sadd.s32 %s12, 1
    %s20 = ssub.s32 %s12, %s19
    %p21 = scmp.eq.s32.totalorder %s20, 0
    %s23 = sadd.s32 %s22, 1
    %s24 = scalar_select %p21, %s22, %s23
    %p27 = pneg %p21
    %p28 = scmp.eq.s32.totalorder %s12, 5
    %p29 = por %p27, %p28
    %p30 = scmp.ne.s32.totalorder %s22, %s25
    %p31 = scmp.eq.s32.totalorder %s12, 0
    %p32 = por %p30, %p31
    %p33 = scmp.ne.s32.totalorder %s22, %s25
    %p34 = scmp.eq.s32.totalorder %s17, 5
    %p35 = por %p33, %p34
    %p36 = scmp.ne.s32.totalorder %s25, %s26
    %p37 = scmp.eq.s32.totalorder %s17, 0
    %p38 = por %p36, %p37
    %p39 = scmp.ne.s32.totalorder %s25, %s26
    %p40 = scmp.eq.s32.totalorder %s18, 5
    %p41 = por %p39, %p40
    %p43 = scmp.ne.s32.totalorder %s26, %s42
    %p44 = scmp.eq.s32.totalorder %s18, 0
    %p45 = por %p43, %p44
    %s47 = sadd.s32 %s46, 1
    %p50 = scmp.eq.s32.totalorder %s12, 5
    %p51 = scmp.ne.s32.totalorder %s46, %s48
    %p52 = scmp.eq.s32.totalorder %s12, 0
    %p53 = por %p51, %p52
    %p54 = scmp.ne.s32.totalorder %s46, %s48
    %p55 = scmp.eq.s32.totalorder %s17, 5
    %p56 = por %p54, %p55
    %p57 = scmp.ne.s32.totalorder %s48, %s49
    %p58 = scmp.eq.s32.totalorder %s17, 0
    %p59 = por %p57, %p58
    %p60 = scmp.ne.s32.totalorder %s48, %s49
    %p61 = scmp.eq.s32.totalorder %s18, 5
    %p62 = por %p60, %p61
    %p64 = scmp.ne.s32.totalorder %s49, %s63
    %p65 = scmp.eq.s32.totalorder %s18, 0
    %p66 = por %p64, %p65
    %s68 = sadd.s32 %s67, 1
    %p71 = scmp.eq.s32.totalorder %s12, 5
    %p72 = scmp.ne.s32.totalorder %s67, %s69
    %p73 = scmp.eq.s32.totalorder %s12, 0
    %p74 = por %p72, %p73
    %p75 = scmp.ne.s32.totalorder %s67, %s69
    %p76 = scmp.eq.s32.totalorder %s17, 5
    %p77 = por %p75, %p76
    %p78 = scmp.ne.s32.totalorder %s69, %s70
    %p79 = scmp.eq.s32.totalorder %s17, 0
    %p80 = por %p78, %p79
    %p81 = scmp.ne.s32.totalorder %s69, %s70
    %p82 = scmp.eq.s32.totalorder %s18, 5
    %p83 = por %p81, %p82
    %p85 = scmp.ne.s32.totalorder %s70, %s84
    %p86 = scmp.eq.s32.totalorder %s18, 0
    %p87 = por %p85, %p86
    %s88 = ssub.s32 %s12, %s19
    %p89 = scmp.eq.s32.totalorder %s88, 0
    %s91 = sadd.s32 %s90, 1
    %s92 = scalar_select %p89, %s90, %s91
    %p95 = pneg %p89
    %p96 = scmp.eq.s32.totalorder %s12, 5
    %p97 = por %p95, %p96
    %p98 = scmp.ne.s32.totalorder %s90, %s93
    %p99 = scmp.eq.s32.totalorder %s12, 0
    %p100 = por %p98, %p99
    %p101 = scmp.ne.s32.totalorder %s90, %s93
    %p102 = scmp.eq.s32.totalorder %s17, 5
    %p103 = por %p101, %p102
    %p104 = scmp.ne.s32.totalorder %s93, %s94
    %p105 = scmp.eq.s32.totalorder %s17, 0
    %p106 = por %p104, %p105
    %p107 = scmp.ne.s32.totalorder %s93, %s94
    %p108 = scmp.eq.s32.totalorder %s18, 5
    %p109 = por %p107, %p108
    %p111 = scmp.ne.s32.totalorder %s94, %s110
    %p112 = scmp.eq.s32.totalorder %s18, 0
    %p113 = por %p111, %p112
    %s114 = ssub.s32 %s12, %s19
    %p115 = scmp.eq.s32.totalorder %s114, 0
    %s117 = sadd.s32 %s116, 1
    %s118 = scalar_select %p115, %s116, %s117
    %p121 = pneg %p115
    %p122 = scmp.eq.s32.totalorder %s12, 5
    %p123 = por %p121, %p122
    %p124 = scmp.ne.s32.totalorder %s116, %s119
    %p125 = scmp.eq.s32.totalorder %s12, 0
    %p126 = por %p124, %p125
    %p127 = scmp.ne.s32.totalorder %s116, %s119
    %p128 = scmp.eq.s32.totalorder %s17, 5
    %p129 = por %p127, %p128
    %p130 = scmp.ne.s32.totalorder %s119, %s120
    %p131 = scmp.eq.s32.totalorder %s17, 0
    %p132 = por %p130, %p131
    %p133 = scmp.ne.s32.totalorder %s119, %s120
    %p134 = scmp.eq.s32.totalorder %s18, 5
    %p135 = por %p133, %p134
    %p137 = scmp.ne.s32.totalorder %s120, %s136
    %p138 = scmp.eq.s32.totalorder %s18, 0
    %p139 = por %p137, %p138
    %s140 = ssub.s32 %s12, %s19
    %p141 = scmp.eq.s32.totalorder %s140, 0
    %s143 = sadd.s32 %s142, 1
    %s144 = scalar_select %p141, %s142, %s143
    %p147 = pneg %p141
    %p148 = scmp.eq.s32.totalorder %s12, 5
    %p149 = por %p147, %p148
    %p150 = scmp.ne.s32.totalorder %s142, %s145
    %p151 = scmp.eq.s32.totalorder %s12, 0
    %p152 = por %p150, %p151
    %p153 = scmp.ne.s32.totalorder %s142, %s145
    %p154 = scmp.eq.s32.totalorder %s17, 5
    %p155 = por %p153, %p154
    %p156 = scmp.ne.s32.totalorder %s145, %s146
    %p157 = scmp.eq.s32.totalorder %s17, 0
    %p158 = por %p156, %p157
    %p159 = scmp.ne.s32.totalorder %s145, %s146
    %p160 = scmp.eq.s32.totalorder %s18, 5
    %p161 = por %p159, %p160
    %p163 = scmp.ne.s32.totalorder %s146, %s162
    %p164 = scmp.eq.s32.totalorder %s18, 0
    %p165 = por %p163, %p164
    %p166 = scmp.le.s32.totalorder 1, %s12
    %p167 = scmp.lt.s32.totalorder %s12, 7
    %p168 = pnand %p166, %p167
    %p169 = pneg %p168
    // Predicated region
    $region9: #{iresidual_xd_forward.3} parent=5 // pred_check
      _
    $region10: #{iresidual_xd_forward.3} parent=5 // pred_check_branch
      %171 = sbr.rel (%p168) target = $region12
    $region11: #{iresidual_xd_forward.3} parent=5 // pred_region
      %s172 = ssub.s32 %s12, 1
      // Predicated region
      $region13: #{iresidual_xd_forward.3} parent=11 // pred_check
        %p173 = pneg %p59
      $region14: #{iresidual_xd_forward.3} parent=11 // pred_check_branch
        %175 = sbr.rel (%p173) target = $region16
      $region15: #{iresidual_xd_forward.3} parent=11 // pred_region
        _
      $region16: #{iresidual_xd_forward.3} parent=11 // pred_fallthru
        _
      // Predicated region
      $region17: #{iresidual_xd_forward.3} parent=11 // pred_check
        %p176 = pneg %p80
      $region18: #{iresidual_xd_forward.3} parent=11 // pred_check_branch
        %178 = sbr.rel (%p176) target = $region20
      $region19: #{iresidual_xd_forward.3} parent=11 // pred_region
        _
      $region20: #{iresidual_xd_forward.3} parent=11 // pred_fallthru
        _
    $region12: #{iresidual_xd_forward.3} parent=5 // pred_fallthru
      _
    %p179 = scmp.lt.s32.totalorder %s12, 6
    // Predicated region
    $region21: #{iresidual_xd_forward.3} parent=5 // pred_check
      %p180 = pneg %p179
    $region22: #{iresidual_xd_forward.3} parent=5 // pred_check_branch
      %182 = sbr.rel (%p180) target = $region24
    $region23: #{iresidual_xd_forward.3} parent=5 // pred_region
      // Predicated region
      $region25: #{iresidual_xd_forward.3} parent=23 // pred_check
        %p183 = pneg %p32
      $region26: #{iresidual_xd_forward.3} parent=23 // pred_check_branch
        %185 = sbr.rel (%p183) target = $region28
      $region27: #{iresidual_xd_forward.3} parent=23 // pred_region
        %p186 = scmp.lt.s32.totalorder %s12, 5
        %s187 = scalar_select %p186, %s12, 5
        %s188 = smul.addr %s187, 2
        %s189 = smul.addr %s188, 8
        %s190 = scalar_lea.vmem %s0, %s189
      $region28: #{iresidual_xd_forward.3} parent=23 // pred_fallthru
        _
    $region24: #{iresidual_xd_forward.3} parent=5 // pred_fallthru
      _
    %p191 = scmp.le.s32.totalorder 1, %s12
    %p192 = scmp.lt.s32.totalorder %s12, 7
    %p193 = pnand %p191, %p192
    %p194 = pneg %p193
    // Predicated region
    $region29: #{iresidual_xd_forward.3} parent=5 // pred_check
      _
    $region30: #{iresidual_xd_forward.3} parent=5 // pred_check_branch
      %196 = sbr.rel (%p193) target = $region32
    $region31: #{iresidual_xd_forward.3} parent=5 // pred_region
      %s197 = ssub.s32 %s12, 1
      %p198 = scmp.lt.s32.totalorder %s17, 5
      %s199 = scalar_select %p198, %s17, 5
      %s200 = smul.addr %s199, 2
      %s201 = smul.addr %s200, 8
      %s202 = scalar_lea.vmem %s0, %s201
      %p203 = pneg %p38
      %p204 = pneg %p35
      %p205 = pneg %p59
      %p206 = pneg %p56
      %p207 = pneg %p80
      %p208 = pneg %p77
      %p209 = pneg %p106
      %p210 = pneg %p103
      %p211 = scmp.lt.s32.totalorder %s17, 5
      %s212 = scalar_select %p211, %s17, 5
      %s213 = smul.addr %s212, 2
      %s214 = smul.addr %s213, 8
      %s215 = scalar_lea.vmem %s3, %s214
      %p216 = pneg %p132
      %p217 = pneg %p129
      %p218 = scmp.lt.s32.totalorder %s17, 5
      %s219 = scalar_select %p218, %s17, 5
      %s220 = scalar_lea.vmem %s4, %s219
      %p221 = pneg %p158
      %p222 = pneg %p155
      %p223 = scmp.lt.s32.totalorder %s17, 5
      %s224 = scalar_select %p223, %s17, 5
      %s225 = scalar_lea.vmem %s5, %s224
      %p226 = scmp.lt.s32.totalorder %s17, 5
      %s227 = scalar_select %p226, %s17, 5
      %s228 = smul.addr %s227, 2
      %s229 = smul.addr %s228, 8
      %s230 = scalar_lea.vmem %s0, %s229
      %p231 = scmp.lt.s32.totalorder %s17, 5
      %s232 = scalar_select %p231, %s17, 5
      %s233 = smul.addr %s232, 2
      %s234 = smul.addr %s233, 8
      %s235 = scalar_lea.vmem %s3, %s234
      %p236 = scmp.lt.s32.totalorder %s17, 5
      %s237 = scalar_select %p236, %s17, 5
      %s238 = scalar_lea.vmem %s4, %s237
      %p239 = scmp.lt.s32.totalorder %s17, 5
      %s240 = scalar_select %p239, %s17, 5
      %s241 = scalar_lea.vmem %s5, %s240
      %v242 = vld [vmem:[%s230] sm:$0xff]
      %v243 = vld [vmem:[%s230 + $0x8] sm:$0xff]
      %vm244 = vcmask 588800
      %245 = vst.msk [vmem:[#allocation2] sm:$0xff] %vm244, 0.0
      %246 = vst.msk [vmem:[#allocation2 + $0x8] sm:$0xff] %vm244, 0.0
      %vm247 = vcmask 582656
      %248 = vst.msk [vmem:[#allocation2 + $0x10] sm:$0x3] %vm247, 0.0
      %251 = vrot.lane.b32.xlu0 %v242, 4
      %v252 = vpop.permute.xlu0 %251
      %253 = vrot.lane.b32.xlu0 %v243, 4
      %v254 = vpop.permute.xlu0 %253
      %vm257 = vcmask 556064
      %258 = vst.msk [vmem:[#allocation2 + $0x1] sm:$0xff] %vm257, %v252
      %259 = vst.msk [vmem:[#allocation2 + $0x9] sm:$0xff] %vm257, %v254
      %v260 = vld [vmem:[#allocation2] sm:$0xff]
      %v261 = vld [vmem:[#allocation2 + $0x8] sm:$0xff]
      %v262 = vld [vmem:[#allocation2 + $0x10] sm:$0x3]
      %v263 = vld [vmem:[%s1] sm:$0xff]
      %v264 = vld [vmem:[%s1 + $0x8] sm:$0xff]
      %v265 = vld [vmem:[%s1 + $0x10] sm:$0xff]
      %v266 = vld [vmem:[%s1 + $0x18] sm:$0xff]
      %v267 = vld [vmem:[%s1 + $0x20] sm:$0xff]
      %v268 = vld [vmem:[%s1 + $0x28] sm:$0xff]
      %v269 = vld [vmem:[%s1 + $0x30] sm:$0xff]
      %v270 = vld [vmem:[%s1 + $0x38] sm:$0xff]
      %v271 = vld [vmem:[%s1 + $0x40] sm:$0xff]
      %s272 = scalar_lea.vmem %s1, 72
      %v273 = vld [vmem:[%s272] sm:$0xff]
      %v274 = vld [vmem:[%s272 + $0x8] sm:$0xff]
      %v275 = vld [vmem:[%s272 + $0x10] sm:$0xff]
      %v276 = vld [vmem:[%s272 + $0x18] sm:$0xff]
      %v277 = vld [vmem:[%s272 + $0x20] sm:$0xff]
      %v278 = vld [vmem:[%s272 + $0x28] sm:$0xff]
      %v279 = vld [vmem:[%s272 + $0x30] sm:$0xff]
      %v280 = vld [vmem:[%s272 + $0x38] sm:$0xff]
      %v281 = vld [vmem:[%s272 + $0x40] sm:$0xff]
      %vm285 = vcmask 1046528
      %v286 = vrot.slane %v260, 1
      %v287 = vrot.slane %v261, 1
      %v288 = vsel %vm285, %v286, %v287
      %v289 = vrot.slane %v262, 1
      %v290 = vsel %vm285, %v287, %v289
      %v291 = vsel %vm244, %v288, 0
      %v293 = vsel %vm244, %v290, 0
      %295 = vmatprep.subr.mxu0 0.0
      %296 = vmatpush1.msra.mxu0 %v273
      %297 = vmatprep.subr.mxu0 0.0
      %298 = vmatpush1.msra.mxu0 %v274
      %299 = vmatprep.subr.mxu0 0.0
      %300 = vmatpush1.msra.mxu0 %v275
      %301 = vmatprep.subr.mxu0 0.0
      %302 = vmatpush1.msra.mxu0 %v276
      %303 = vmatprep.subr.mxu0 0.0
      %304 = vmatpush1.msra.mxu0 %v277
      %305 = vmatprep.subr.mxu0 0.0
      %306 = vmatpush1.msra.mxu0 %v278
      %307 = vmatprep.subr.mxu0 0.0
      %308 = vmatpush1.msra.mxu0 %v279
      %309 = vmatprep.subr.mxu0 0.0
      %310 = vmatpush1.msra.mxu0 %v280
      %311 = vmatprep.subr.mxu0 0.0
      %312 = vmatpush1.msra.mxu0 %v281
      %313 = vmatprep.subr.mxu0 0.0
      %314 = vmatpush1.msra.mxu0 0.0
      %315 = vmatprep.subr.mxu0 0.0
      %316 = vmatpush1.msra.mxu0 0.0
      %317 = vmatprep.subr.mxu0 0.0
      %318 = vmatpush1.msra.mxu0 0.0
      %319 = vmatprep.subr.mxu0 0.0
      %320 = vmatpush1.msra.mxu0 0.0
      %321 = vmatprep.subr.mxu0 0.0
      %322 = vmatpush1.msra.mxu0 0.0
      %323 = vmatprep.subr.mxu0 0.0
      %324 = vmatpush1.msra.mxu0 0.0
      %325 = vmatprep.subr.mxu0 0.0
      %326 = vmatpush1.msra.mxu0 0.0
      %327 = vmatprep.subr.mxu0 0.0
      %328 = vmatpush1.msra.mxu0 0.0
      %329 = vmatprep.subr.mxu0 0.0
      %330 = vmatpush1.msra.mxu0 0.0
      %331 = vmatprep.subr.mxu0 0.0
      %332 = vmatpush1.msra.mxu0 0.0
      %333 = vmatprep.subr.mxu0 0.0
      %334 = vmatpush1.msra.mxu0 0.0
      %335 = vmatprep.subr.mxu0 0.0
      %336 = vmatpush1.msra.mxu0 0.0
      %337 = vmatprep.subr.mxu0 0.0
      %338 = vmatpush1.msra.mxu0 0.0
      %339 = vmatprep.subr.mxu0 0.0
      %340 = vmatpush1.msra.mxu0 0.0
      %341 = vmatprep.subr.mxu0 0.0
      %342 = vmatpush1.msra.mxu0 0.0
      %343 = vmatprep.subr.mxu0 0.0
      %344 = vmatpush1.msra.mxu0 0.0
      %345 = vmatprep.subr.mxu0 0.0
      %346 = vmatpush1.msra.mxu0 0.0
      %347 = vmatprep.subr.mxu0 0.0
      %348 = vmatpush1.msra.mxu0 0.0
      %349 = vmatprep.subr.mxu0 0.0
      %350 = vmatpush1.msra.mxu0 0.0
      %351 = vmatprep.subr.mxu0 0.0
      %352 = vmatpush1.msra.mxu0 0.0
      %353 = vmatprep.subr.mxu0 0.0
      %354 = vmatpush1.msra.mxu0 0.0
      %355 = vmatprep.subr.mxu0 0.0
      %356 = vmatpush1.msra.mxu0 0.0
      %357 = vmatprep.subr.mxu0 0.0
      %358 = vmatpush1.msra.mxu0 0.0
      %359 = vmatprep.mubr.f32.mxu0 0.0
      %360 = vmatmul.mubr.f32.gmra.mrb[0].mxu0 %v291
      %v361 = vpop.f32.mrb[0].mxu0
      %v362 = vadd.f32 0.0, %v361
      %v363 = vpop.f32.mrb[0].mxu0
      %364 = vmatprep.mubr.f32.mxu0 0.0
      %365 = vmatmul.mubr.f32.gmra.mrb[0].mxu0 %v293
      %v366 = vpop.f32.mrb[0].mxu0
      %v367 = vadd.f32 0.0, %v366
      %v368 = vpop.f32.mrb[0].mxu0
      %369 = vdwg.mxu0
      %v370 = vsel %vm244, %v260, 0
      %v372 = vsel %vm244, %v261, 0
      %374 = vmatprep.subr.mxu0 0.0
      %375 = vmatpush1.msra.mxu0 %v263
      %376 = vmatprep.subr.mxu0 0.0
      %377 = vmatpush1.msra.mxu0 %v264
      %378 = vmatprep.subr.mxu0 0.0
      %379 = vmatpush1.msra.mxu0 %v265
      %380 = vmatprep.subr.mxu0 0.0
      %381 = vmatpush1.msra.mxu0 %v266
      %382 = vmatprep.subr.mxu0 0.0
      %383 = vmatpush1.msra.mxu0 %v267
      %384 = vmatprep.subr.mxu0 0.0
      %385 = vmatpush1.msra.mxu0 %v268
      %386 = vmatprep.subr.mxu0 0.0
      %387 = vmatpush1.msra.mxu0 %v269
      %388 = vmatprep.subr.mxu0 0.0
      %389 = vmatpush1.msra.mxu0 %v270
      %390 = vmatprep.subr.mxu0 0.0
      %391 = vmatpush1.msra.mxu0 %v271
      %392 = vmatprep.subr.mxu0 0.0
      %393 = vmatpush1.msra.mxu0 0.0
      %394 = vmatprep.subr.mxu0 0.0
      %395 = vmatpush1.msra.mxu0 0.0
      %396 = vmatprep.subr.mxu0 0.0
      %397 = vmatpush1.msra.mxu0 0.0
      %398 = vmatprep.subr.mxu0 0.0
      %399 = vmatpush1.msra.mxu0 0.0
      %400 = vmatprep.subr.mxu0 0.0
      %401 = vmatpush1.msra.mxu0 0.0
      %402 = vmatprep.subr.mxu0 0.0
      %403 = vmatpush1.msra.mxu0 0.0
      %404 = vmatprep.subr.mxu0 0.0
      %405 = vmatpush1.msra.mxu0 0.0
      %406 = vmatprep.subr.mxu0 0.0
      %407 = vmatpush1.msra.mxu0 0.0
      %408 = vmatprep.subr.mxu0 0.0
      %409 = vmatpush1.msra.mxu0 0.0
      %410 = vmatprep.subr.mxu0 0.0
      %411 = vmatpush1.msra.mxu0 0.0
      %412 = vmatprep.subr.mxu0 0.0
      %413 = vmatpush1.msra.mxu0 0.0
      %414 = vmatprep.subr.mxu0 0.0
      %415 = vmatpush1.msra.mxu0 0.0
      %416 = vmatprep.subr.mxu0 0.0
      %417 = vmatpush1.msra.mxu0 0.0
      %418 = vmatprep.subr.mxu0 0.0
      %419 = vmatpush1.msra.mxu0 0.0
      %420 = vmatprep.subr.mxu0 0.0
      %421 = vmatpush1.msra.mxu0 0.0
      %422 = vmatprep.subr.mxu0 0.0
      %423 = vmatpush1.msra.mxu0 0.0
      %424 = vmatprep.subr.mxu0 0.0
      %425 = vmatpush1.msra.mxu0 0.0
      %426 = vmatprep.subr.mxu0 0.0
      %427 = vmatpush1.msra.mxu0 0.0
      %428 = vmatprep.subr.mxu0 0.0
      %429 = vmatpush1.msra.mxu0 0.0
      %430 = vmatprep.subr.mxu0 0.0
      %431 = vmatpush1.msra.mxu0 0.0
      %432 = vmatprep.subr.mxu0 0.0
      %433 = vmatpush1.msra.mxu0 0.0
      %434 = vmatprep.subr.mxu0 0.0
      %435 = vmatpush1.msra.mxu0 0.0
      %436 = vmatprep.subr.mxu0 0.0
      %437 = vmatpush1.msra.mxu0 0.0
      %438 = vmatprep.mubr.f32.mxu0 0.0
      %439 = vmatmul.mubr.f32.gmra.mrb[0].mxu0 %v370
      %v440 = vpop.f32.mrb[0].mxu0
      %v441 = vadd.f32 %v362, %v440
      %v442 = vpop.f32.mrb[0].mxu0
      %443 = vmatprep.mubr.f32.mxu0 0.0
      %444 = vmatmul.mubr.f32.gmra.mrb[0].mxu0 %v372
      %v445 = vpop.f32.mrb[0].mxu0
      %v446 = vadd.f32 %v367, %v445
      %v447 = vpop.f32.mrb[0].mxu0
      %448 = vdwg.mxu0
      %s449 = scalar_lea.vmem %s1, 144
      %v450 = vld [vmem:[%s449] sm:$0xff]
      %v451 = vld [vmem:[%s449 + $0x8] sm:$0xff]
      %v452 = vld [vmem:[%s449 + $0x10] sm:$0xff]
      %v453 = vld [vmem:[%s449 + $0x18] sm:$0xff]
      %v454 = vld [vmem:[%s449 + $0x20] sm:$0xff]
      %v455 = vld [vmem:[%s449 + $0x28] sm:$0xff]
      %v456 = vld [vmem:[%s449 + $0x30] sm:$0xff]
      %v457 = vld [vmem:[%s449 + $0x38] sm:$0xff]
      %v458 = vld [vmem:[%s449 + $0x40] sm:$0xff]
      %vm459 = vcmask 1045504
      %v460 = vrot.slane %v260, 2
      %v461 = vrot.slane %v261, 2
      %v462 = vsel %vm459, %v460, %v461
      %v463 = vrot.slane %v262, 2
      %v464 = vsel %vm459, %v461, %v463
      %v465 = vsel %vm244, %v462, 0
      %v467 = vsel %vm244, %v464, 0
      %469 = vmatprep.subr.mxu0 0.0
      %470 = vmatpush1.msra.mxu0 %v450
      %471 = vmatprep.subr.mxu0 0.0
      %472 = vmatpush1.msra.mxu0 %v451
      %473 = vmatprep.subr.mxu0 0.0
      %474 = vmatpush1.msra.mxu0 %v452
      %475 = vmatprep.subr.mxu0 0.0
      %476 = vmatpush1.msra.mxu0 %v453
      %477 = vmatprep.subr.mxu0 0.0
      %478 = vmatpush1.msra.mxu0 %v454
      %479 = vmatprep.subr.mxu0 0.0
      %480 = vmatpush1.msra.mxu0 %v455
      %481 = vmatprep.subr.mxu0 0.0
      %482 = vmatpush1.msra.mxu0 %v456
      %483 = vmatprep.subr.mxu0 0.0
      %484 = vmatpush1.msra.mxu0 %v457
      %485 = vmatprep.subr.mxu0 0.0
      %486 = vmatpush1.msra.mxu0 %v458
      %487 = vmatprep.subr.mxu0 0.0
      %488 = vmatpush1.msra.mxu0 0.0
      %489 = vmatprep.subr.mxu0 0.0
      %490 = vmatpush1.msra.mxu0 0.0
      %491 = vmatprep.subr.mxu0 0.0
      %492 = vmatpush1.msra.mxu0 0.0
      %493 = vmatprep.subr.mxu0 0.0
      %494 = vmatpush1.msra.mxu0 0.0
      %495 = vmatprep.subr.mxu0 0.0
      %496 = vmatpush1.msra.mxu0 0.0
      %497 = vmatprep.subr.mxu0 0.0
      %498 = vmatpush1.msra.mxu0 0.0
      %499 = vmatprep.subr.mxu0 0.0
      %500 = vmatpush1.msra.mxu0 0.0
      %501 = vmatprep.subr.mxu0 0.0
      %502 = vmatpush1.msra.mxu0 0.0
      %503 = vmatprep.subr.mxu0 0.0
      %504 = vmatpush1.msra.mxu0 0.0
      %505 = vmatprep.subr.mxu0 0.0
      %506 = vmatpush1.msra.mxu0 0.0
      %507 = vmatprep.subr.mxu0 0.0
      %508 = vmatpush1.msra.mxu0 0.0
      %509 = vmatprep.subr.mxu0 0.0
      %510 = vmatpush1.msra.mxu0 0.0
      %511 = vmatprep.subr.mxu0 0.0
      %512 = vmatpush1.msra.mxu0 0.0
      %513 = vmatprep.subr.mxu0 0.0
      %514 = vmatpush1.msra.mxu0 0.0
      %515 = vmatprep.subr.mxu0 0.0
      %516 = vmatpush1.msra.mxu0 0.0
      %517 = vmatprep.subr.mxu0 0.0
      %518 = vmatpush1.msra.mxu0 0.0
      %519 = vmatprep.subr.mxu0 0.0
      %520 = vmatpush1.msra.mxu0 0.0
      %521 = vmatprep.subr.mxu0 0.0
      %522 = vmatpush1.msra.mxu0 0.0
      %523 = vmatprep.subr.mxu0 0.0
      %524 = vmatpush1.msra.mxu0 0.0
      %525 = vmatprep.subr.mxu0 0.0
      %526 = vmatpush1.msra.mxu0 0.0
      %527 = vmatprep.subr.mxu0 0.0
      %528 = vmatpush1.msra.mxu0 0.0
      %529 = vmatprep.subr.mxu0 0.0
      %530 = vmatpush1.msra.mxu0 0.0
      %531 = vmatprep.subr.mxu0 0.0
      %532 = vmatpush1.msra.mxu0 0.0
      %533 = vmatprep.mubr.f32.mxu0 0.0
      %534 = vmatmul.mubr.f32.gmra.mrb[0].mxu0 %v465
      %v535 = vpop.f32.mrb[0].mxu0
      %v536 = vadd.f32 0.0, %v535
      %v537 = vpop.f32.mrb[0].mxu0
      %538 = vmatprep.mubr.f32.mxu0 0.0
      %539 = vmatmul.mubr.f32.gmra.mrb[0].mxu0 %v467
      %v540 = vpop.f32.mrb[0].mxu0
      %v541 = vadd.f32 0.0, %v540
      %v542 = vpop.f32.mrb[0].mxu0
      %543 = vdwg.mxu0
      %v544 = vadd.f32 %v441, %v536
      %v545 = vadd.f32 %v446, %v541
      %vm546 = vcmask 523264
      %547 = vst.msk [vmem:[%s235] sm:$0xff] %vm546, %v544
      %548 = vst.msk [vmem:[%s235 + $0x8] sm:$0xff] %vm546, %v545
      %v549 = vld [vmem:[%s2] sm:$0xff]
      %v550 = vld [vmem:[%s2 + $0x8] sm:$0xff]
      %v551 = vld [vmem:[%s2 + $0x10] sm:$0xff]
      %v552 = vld [vmem:[%s2 + $0x18] sm:$0xff]
      %v553 = vld [vmem:[%s2 + $0x20] sm:$0xff]
      %v554 = vld [vmem:[%s2 + $0x28] sm:$0xff]
      %v555 = vld [vmem:[%s2 + $0x30] sm:$0xff]
      %v556 = vld [vmem:[%s2 + $0x38] sm:$0xff]
      %v558 = vsel %vm546, %v544, 0
      %v561 = vsel %vm546, %v545, 0
      %563 = vmatprep.subr.mxu0 0.0
      %564 = vmatpush1.msra.mxu0 %v549
      %565 = vmatprep.subr.mxu0 0.0
      %566 = vmatpush1.msra.mxu0 %v550
      %567 = vmatprep.subr.mxu0 0.0
      %568 = vmatpush1.msra.mxu0 %v551
      %569 = vmatprep.subr.mxu0 0.0
      %570 = vmatpush1.msra.mxu0 %v552
      %571 = vmatprep.subr.mxu0 0.0
      %572 = vmatpush1.msra.mxu0 %v553
      %573 = vmatprep.subr.mxu0 0.0
      %574 = vmatpush1.msra.mxu0 %v554
      %575 = vmatprep.subr.mxu0 0.0
      %576 = vmatpush1.msra.mxu0 %v555
      %577 = vmatprep.subr.mxu0 0.0
      %578 = vmatpush1.msra.mxu0 %v556
      %579 = vmatprep.subr.mxu0 0.0
      %580 = vmatpush1.msra.mxu0 0.0
      %581 = vmatprep.subr.mxu0 0.0
      %582 = vmatpush1.msra.mxu0 0.0
      %583 = vmatprep.subr.mxu0 0.0
      %584 = vmatpush1.msra.mxu0 0.0
      %585 = vmatprep.subr.mxu0 0.0
      %586 = vmatpush1.msra.mxu0 0.0
      %587 = vmatprep.subr.mxu0 0.0
      %588 = vmatpush1.msra.mxu0 0.0
      %589 = vmatprep.subr.mxu0 0.0
      %590 = vmatpush1.msra.mxu0 0.0
      %591 = vmatprep.subr.mxu0 0.0
      %592 = vmatpush1.msra.mxu0 0.0
      %593 = vmatprep.subr.mxu0 0.0
      %594 = vmatpush1.msra.mxu0 0.0
      %595 = vmatprep.subr.mxu0 0.0
      %596 = vmatpush1.msra.mxu0 0.0
      %597 = vmatprep.subr.mxu0 0.0
      %598 = vmatpush1.msra.mxu0 0.0
      %599 = vmatprep.subr.mxu0 0.0
      %600 = vmatpush1.msra.mxu0 0.0
      %601 = vmatprep.subr.mxu0 0.0
      %602 = vmatpush1.msra.mxu0 0.0
      %603 = vmatprep.subr.mxu0 0.0
      %604 = vmatpush1.msra.mxu0 0.0
      %605 = vmatprep.subr.mxu0 0.0
      %606 = vmatpush1.msra.mxu0 0.0
      %607 = vmatprep.subr.mxu0 0.0
      %608 = vmatpush1.msra.mxu0 0.0
      %609 = vmatprep.subr.mxu0 0.0
      %610 = vmatpush1.msra.mxu0 0.0
      %611 = vmatprep.subr.mxu0 0.0
      %612 = vmatpush1.msra.mxu0 0.0
      %613 = vmatprep.subr.mxu0 0.0
      %614 = vmatpush1.msra.mxu0 0.0
      %615 = vmatprep.subr.mxu0 0.0
      %616 = vmatpush1.msra.mxu0 0.0
      %617 = vmatprep.subr.mxu0 0.0
      %618 = vmatpush1.msra.mxu0 0.0
      %619 = vmatprep.subr.mxu0 0.0
      %620 = vmatpush1.msra.mxu0 0.0
      %621 = vmatprep.subr.mxu0 0.0
      %622 = vmatpush1.msra.mxu0 0.0
      %623 = vmatprep.subr.mxu0 0.0
      %624 = vmatpush1.msra.mxu0 0.0
      %625 = vmatprep.subr.mxu0 0.0
      %626 = vmatpush1.msra.mxu0 0.0
      %627 = vmatprep.mubr.f32.mxu0 0.0
      %628 = vmatmul.mubr.f32.gmra.mrb[0].mxu0 %v558
      %v629 = vpop.f32.mrb[0].mxu0
      %v630 = vadd.f32 0.0, %v629
      %v631 = vpop.f32.mrb[0].mxu0
      %632 = vmatprep.mubr.f32.mxu0 0.0
      %633 = vmatmul.mubr.f32.gmra.mrb[0].mxu0 %v561
      %v634 = vpop.f32.mrb[0].mxu0
      %v635 = vadd.f32 0.0, %v634
      %v636 = vpop.f32.mrb[0].mxu0
      %637 = vdwg.mxu0
      %vm638 = vcmask 31744
      %v639 = vsel %vm638, %v630, 0.0
      %v640 = vsel %vm638, %v635, 0.0
      %v641 = vadd.f32 %v639, %v640
      %v642 = vrot.slane %v641, 4
      %v643 = vadd.f32 %v641, %v642
      %v644 = vrot.slane %v643, 2
      %v645 = vadd.f32 %v643, %v644
      %v646 = vrot.slane %v645, 1
      %v647 = vadd.f32 %v645, %v646
      %v648 = vmul.f32 %v544, %v544
      %v649 = vmul.f32 %v545, %v545
      %v651 = vsel %vm546, %v648, 0
      %v654 = vsel %vm546, %v649, 0
      %656 = vmatprep.subr.mxu0 0.0
      %657 = vmatpush1.msra.mxu0 %v549
      %658 = vmatprep.subr.mxu0 0.0
      %659 = vmatpush1.msra.mxu0 %v550
      %660 = vmatprep.subr.mxu0 0.0
      %661 = vmatpush1.msra.mxu0 %v551
      %662 = vmatprep.subr.mxu0 0.0
      %663 = vmatpush1.msra.mxu0 %v552
      %664 = vmatprep.subr.mxu0 0.0
      %665 = vmatpush1.msra.mxu0 %v553
      %666 = vmatprep.subr.mxu0 0.0
      %667 = vmatpush1.msra.mxu0 %v554
      %668 = vmatprep.subr.mxu0 0.0
      %669 = vmatpush1.msra.mxu0 %v555
      %670 = vmatprep.subr.mxu0 0.0
      %671 = vmatpush1.msra.mxu0 %v556
      %672 = vmatprep.subr.mxu0 0.0
      %673 = vmatpush1.msra.mxu0 0.0
      %674 = vmatprep.subr.mxu0 0.0
      %675 = vmatpush1.msra.mxu0 0.0
      %676 = vmatprep.subr.mxu0 0.0
      %677 = vmatpush1.msra.mxu0 0.0
      %678 = vmatprep.subr.mxu0 0.0
      %679 = vmatpush1.msra.mxu0 0.0
      %680 = vmatprep.subr.mxu0 0.0
      %681 = vmatpush1.msra.mxu0 0.0
      %682 = vmatprep.subr.mxu0 0.0
      %683 = vmatpush1.msra.mxu0 0.0
      %684 = vmatprep.subr.mxu0 0.0
      %685 = vmatpush1.msra.mxu0 0.0
      %686 = vmatprep.subr.mxu0 0.0
      %687 = vmatpush1.msra.mxu0 0.0
      %688 = vmatprep.subr.mxu0 0.0
      %689 = vmatpush1.msra.mxu0 0.0
      %690 = vmatprep.subr.mxu0 0.0
      %691 = vmatpush1.msra.mxu0 0.0
      %692 = vmatprep.subr.mxu0 0.0
      %693 = vmatpush1.msra.mxu0 0.0
      %694 = vmatprep.subr.mxu0 0.0
      %695 = vmatpush1.msra.mxu0 0.0
      %696 = vmatprep.subr.mxu0 0.0
      %697 = vmatpush1.msra.mxu0 0.0
      %698 = vmatprep.subr.mxu0 0.0
      %699 = vmatpush1.msra.mxu0 0.0
      %700 = vmatprep.subr.mxu0 0.0
      %701 = vmatpush1.msra.mxu0 0.0
      %702 = vmatprep.subr.mxu0 0.0
      %703 = vmatpush1.msra.mxu0 0.0
      %704 = vmatprep.subr.mxu0 0.0
      %705 = vmatpush1.msra.mxu0 0.0
      %706 = vmatprep.subr.mxu0 0.0
      %707 = vmatpush1.msra.mxu0 0.0
      %708 = vmatprep.subr.mxu0 0.0
      %709 = vmatpush1.msra.mxu0 0.0
      %710 = vmatprep.subr.mxu0 0.0
      %711 = vmatpush1.msra.mxu0 0.0
      %712 = vmatprep.subr.mxu0 0.0
      %713 = vmatpush1.msra.mxu0 0.0
      %714 = vmatprep.subr.mxu0 0.0
      %715 = vmatpush1.msra.mxu0 0.0
      %716 = vmatprep.subr.mxu0 0.0
      %717 = vmatpush1.msra.mxu0 0.0
      %718 = vmatprep.subr.mxu0 0.0
      %719 = vmatpush1.msra.mxu0 0.0
      %720 = vmatprep.mubr.f32.mxu0 0.0
      %721 = vmatmul.mubr.f32.gmra.mrb[0].mxu0 %v651
      %v722 = vpop.f32.mrb[0].mxu0
      %v723 = vadd.f32 0.0, %v722
      %v724 = vpop.f32.mrb[0].mxu0
      %725 = vmatprep.mubr.f32.mxu0 0.0
      %726 = vmatmul.mubr.f32.gmra.mrb[0].mxu0 %v654
      %v727 = vpop.f32.mrb[0].mxu0
      %v728 = vadd.f32 0.0, %v727
      %v729 = vpop.f32.mrb[0].mxu0
      %730 = vdwg.mxu0
      %v731 = vsel %vm638, %v723, 0.0
      %v732 = vsel %vm638, %v728, 0.0
      %v733 = vadd.f32 %v731, %v732
      %v734 = vrot.slane %v733, 4
      %v735 = vadd.f32 %v733, %v734
      %v736 = vrot.slane %v735, 2
      %v737 = vadd.f32 %v735, %v736
      %v738 = vrot.slane %v737, 1
      %v739 = vadd.f32 %v737, %v738
      %vm740 = vcmask 24576
      %741 = vst.msk [vmem:[%s238] sm:$0x1] %vm740, %v647
      %742 = vst.msk [vmem:[%s241] sm:$0x1] %vm740, %v739
      %p743 = scmp.lt.s32.totalorder %s17, 5
      %s744 = scalar_select %p743, %s17, 5
      %s745 = smul.addr %s744, 2
      %s746 = smul.addr %s745, 8
      %s747 = scalar_lea.vmem %s3, %s746
      %p748 = scmp.lt.s32.totalorder %s17, 5
      %s749 = scalar_select %p748, %s17, 5
      %s750 = scalar_lea.vmem %s4, %s749
      %p751 = scmp.lt.s32.totalorder %s17, 5
      %s752 = scalar_select %p751, %s17, 5
      %s753 = scalar_lea.vmem %s5, %s752
      // Predicated region
      $region33: #{iresidual_xd_forward.3} parent=31 // pred_check
        %p754 = pneg %p103
      $region34: #{iresidual_xd_forward.3} parent=31 // pred_check_branch
        %756 = sbr.rel (%p754) target = $region36
      $region35: #{iresidual_xd_forward.3} parent=31 // pred_region
        _
      $region36: #{iresidual_xd_forward.3} parent=31 // pred_fallthru
        _
      // Predicated region
      $region37: #{iresidual_xd_forward.3} parent=31 // pred_check
        %p757 = pneg %p129
      $region38: #{iresidual_xd_forward.3} parent=31 // pred_check_branch
        %759 = sbr.rel (%p757) target = $region40
      $region39: #{iresidual_xd_forward.3} parent=31 // pred_region
        _
      $region40: #{iresidual_xd_forward.3} parent=31 // pred_fallthru
        _
      // Predicated region
      $region41: #{iresidual_xd_forward.3} parent=31 // pred_check
        %p760 = pneg %p155
      $region42: #{iresidual_xd_forward.3} parent=31 // pred_check_branch
        %762 = sbr.rel (%p760) target = $region44
      $region43: #{iresidual_xd_forward.3} parent=31 // pred_region
        _
      $region44: #{iresidual_xd_forward.3} parent=31 // pred_fallthru
        _
    $region32: #{iresidual_xd_forward.3} parent=5 // pred_fallthru
      _
    %p763 = scmp.le.s32.totalorder 2, %s12
    // Predicated region
    $region45: #{iresidual_xd_forward.3} parent=5 // pred_check
      %p764 = pneg %p763
    $region46: #{iresidual_xd_forward.3} parent=5 // pred_check_branch
      %766 = sbr.rel (%p764) target = $region48
    $region47: #{iresidual_xd_forward.3} parent=5 // pred_region
      %s767 = ssub.s32 %s12, 2
      // Predicated region
      $region49: #{iresidual_xd_forward.3} parent=47 // pred_check
        %p768 = pneg %p109
      $region50: #{iresidual_xd_forward.3} parent=47 // pred_check_branch
        %770 = sbr.rel (%p768) target = $region52
      $region51: #{iresidual_xd_forward.3} parent=47 // pred_region
        %p771 = scmp.lt.s32.totalorder %s18, 5
        %s772 = scalar_select %p771, %s18, 5
        %s773 = smul.addr %s772, 2
        %s774 = smul.addr %s773, 8
        %s775 = scalar_lea.vmem %s3, %s774
      $region52: #{iresidual_xd_forward.3} parent=47 // pred_fallthru
        _
      // Predicated region
      $region53: #{iresidual_xd_forward.3} parent=47 // pred_check
        %p776 = pneg %p135
      $region54: #{iresidual_xd_forward.3} parent=47 // pred_check_branch
        %778 = sbr.rel (%p776) target = $region56
      $region55: #{iresidual_xd_forward.3} parent=47 // pred_region
        %p779 = scmp.lt.s32.totalorder %s18, 5
        %s780 = scalar_select %p779, %s18, 5
        %s781 = scalar_lea.vmem %s4, %s780
      $region56: #{iresidual_xd_forward.3} parent=47 // pred_fallthru
        _
      // Predicated region
      $region57: #{iresidual_xd_forward.3} parent=47 // pred_check
        %p782 = pneg %p161
      $region58: #{iresidual_xd_forward.3} parent=47 // pred_check_branch
        %784 = sbr.rel (%p782) target = $region60
      $region59: #{iresidual_xd_forward.3} parent=47 // pred_region
        %p785 = scmp.lt.s32.totalorder %s18, 5
        %s786 = scalar_select %p785, %s18, 5
        %s787 = scalar_lea.vmem %s5, %s786
      $region60: #{iresidual_xd_forward.3} parent=47 // pred_fallthru
        _
    $region48: #{iresidual_xd_forward.3} parent=5 // pred_fallthru
      _
  $region6: #{iresidual_xd_forward.3} parent=0 // loop_footer
    %s16 = sadd.s32 1, %s12
  $region7: #{iresidual_xd_forward.3} parent=0 // loop_footer_branch
    %11 = sbr.rel target = $region3
  $region8: #{iresidual_xd_forward.3} parent=0 // loop_exit
    _

// kernel: iresidual_xd_forward.4
$region0: #{iresidual_xd_forward.4}
  #allocation0 [shape = 'u32[]', space=smem, size = 0x4, offset = 0x4, fixed_abs, tag = 'smem constant byte address 0x4 - core index']
  #allocation1 [shape = 'u32[144,128]{1,0:T(1,128)}', space=vmem, size = 0x12000, scoped, tag = 'internal scratch']
  #allocation2 [shape = 'f32[18,72]{1,0:T(8,128)}', space=vmem, size = 0x3000, scoped, tag = 'scratch operand']
  %s0 = inlined_call_operand.vmem [shape: f32[6,16,64], index: 0, kind: input, shape index: {}]
  %s1 = inlined_call_operand.vmem [shape: f32[1,64], index: 1, kind: input, shape index: {}]
  %s2 = inlined_call_operand.vmem [shape: f32[1,64], index: 2, kind: input, shape index: {}]
  %s3 = inlined_call_operand.vmem [shape: f32[3,72,64], index: 3, kind: input, shape index: {}]
  %s4 = inlined_call_operand.vmem [shape: f32[64,4], index: 4, kind: input, shape index: {}]
  %s5 = inlined_call_operand.vmem [shape: f32[6,16,64], index: 5, kind: output, shape index: {0}]
  %s6 = inlined_call_operand.vmem [shape: f32[6,1,4], index: 6, kind: output, shape index: {1}]
  %s7 = inlined_call_operand.vmem [shape: f32[6,1,4], index: 7, kind: output, shape index: {2}]
  %8 = xla_tuple %s5, %s6, %s7
  %s9 = sld [smem:[#allocation0]]
  $region69: #{iresidual_xd_forward.4} parent=0
    _
  %s11 = ssub.s32 1, %s9
  %s12 = scalar_select 0, %s11, %s9
  loop: start=0, step=1, limit=8
  $region2: #{iresidual_xd_forward.4} parent=0 // loop_pre_header
    _
  $region3: #{iresidual_xd_forward.4} parent=0 // loop_header
    %s14 = sphi 0, %s18
    %p15 = scmp.ge.s32.totalorder %s14, 8
    %s24 = sphi 0, %s26
    %s27 = sphi 0, %s24
    %s28 = sphi 0, %s27
    %s44 = sphi 0, %s28
    %s48 = sphi 0, %s48
    %s50 = sphi 0, %s48
    %s51 = sphi 0, %s50
    %s65 = sphi 0, %s51
    %s69 = sphi 0, %s69
    %s71 = sphi 0, %s69
    %s72 = sphi 0, %s71
    %s86 = sphi 0, %s72
    %s90 = sphi 0, %s90
    %s92 = sphi 0, %s90
    %s93 = sphi 0, %s92
    %s107 = sphi 0, %s93
    %s111 = sphi 0, %s111
    %s113 = sphi 0, %s111
    %s114 = sphi 0, %s113
    %s128 = sphi 0, %s114
    %s134 = sphi 0, %s136
    %s137 = sphi 0, %s134
    %s138 = sphi 0, %s137
    %s154 = sphi 0, %s138
    %s160 = sphi 0, %s162
    %s163 = sphi 0, %s160
    %s164 = sphi 0, %s163
    %s180 = sphi 0, %s164
    %s186 = sphi 0, %s188
    %s189 = sphi 0, %s186
    %s190 = sphi 0, %s189
    %s206 = sphi 0, %s190
  $region4: #{iresidual_xd_forward.4} parent=0 // loop_header_branch
    %17 = sbr.rel (%p15) target = $region8
  $region5: #{iresidual_xd_forward.4} parent=0 // loop_body
    %s19 = ssub.s32 %s14, 1
    %s20 = ssub.s32 %s14, 2
    %s21 = sadd.s32 %s14, 1
    %s22 = ssub.s32 %s14, %s21
    %p23 = scmp.eq.s32.totalorder %s22, 0
    %s25 = sadd.s32 %s24, 1
    %s26 = scalar_select %p23, %s24, %s25
    %p29 = pneg %p23
    %p30 = scmp.eq.s32.totalorder %s14, 5
    %p31 = por %p29, %p30
    %p32 = scmp.ne.s32.totalorder %s24, %s27
    %p33 = scmp.eq.s32.totalorder %s14, 0
    %p34 = por %p32, %p33
    %p35 = scmp.ne.s32.totalorder %s24, %s27
    %p36 = scmp.eq.s32.totalorder %s19, 5
    %p37 = por %p35, %p36
    %p38 = scmp.ne.s32.totalorder %s27, %s28
    %p39 = scmp.eq.s32.totalorder %s19, 0
    %p40 = por %p38, %p39
    %p41 = scmp.ne.s32.totalorder %s27, %s28
    %p42 = scmp.eq.s32.totalorder %s20, 5
    %p43 = por %p41, %p42
    %p45 = scmp.ne.s32.totalorder %s28, %s44
    %p46 = scmp.eq.s32.totalorder %s20, 0
    %p47 = por %p45, %p46
    %s49 = sadd.s32 %s48, 1
    %p52 = scmp.eq.s32.totalorder %s14, 5
    %p53 = scmp.ne.s32.totalorder %s48, %s50
    %p54 = scmp.eq.s32.totalorder %s14, 0
    %p55 = por %p53, %p54
    %p56 = scmp.ne.s32.totalorder %s48, %s50
    %p57 = scmp.eq.s32.totalorder %s19, 5
    %p58 = por %p56, %p57
    %p59 = scmp.ne.s32.totalorder %s50, %s51
    %p60 = scmp.eq.s32.totalorder %s19, 0
    %p61 = por %p59, %p60
    %p62 = scmp.ne.s32.totalorder %s50, %s51
    %p63 = scmp.eq.s32.totalorder %s20, 5
    %p64 = por %p62, %p63
    %p66 = scmp.ne.s32.totalorder %s51, %s65
    %p67 = scmp.eq.s32.totalorder %s20, 0
    %p68 = por %p66, %p67
    %s70 = sadd.s32 %s69, 1
    %p73 = scmp.eq.s32.totalorder %s14, 5
    %p74 = scmp.ne.s32.totalorder %s69, %s71
    %p75 = scmp.eq.s32.totalorder %s14, 0
    %p76 = por %p74, %p75
    %p77 = scmp.ne.s32.totalorder %s69, %s71
    %p78 = scmp.eq.s32.totalorder %s19, 5
    %p79 = por %p77, %p78
    %p80 = scmp.ne.s32.totalorder %s71, %s72
    %p81 = scmp.eq.s32.totalorder %s19, 0
    %p82 = por %p80, %p81
    %p83 = scmp.ne.s32.totalorder %s71, %s72
    %p84 = scmp.eq.s32.totalorder %s20, 5
    %p85 = por %p83, %p84
    %p87 = scmp.ne.s32.totalorder %s72, %s86
    %p88 = scmp.eq.s32.totalorder %s20, 0
    %p89 = por %p87, %p88
    %s91 = sadd.s32 %s90, 1
    %p94 = scmp.eq.s32.totalorder %s14, 5
    %p95 = scmp.ne.s32.totalorder %s90, %s92
    %p96 = scmp.eq.s32.totalorder %s14, 0
    %p97 = por %p95, %p96
    %p98 = scmp.ne.s32.totalorder %s90, %s92
    %p99 = scmp.eq.s32.totalorder %s19, 5
    %p100 = por %p98, %p99
    %p101 = scmp.ne.s32.totalorder %s92, %s93
    %p102 = scmp.eq.s32.totalorder %s19, 0
    %p103 = por %p101, %p102
    %p104 = scmp.ne.s32.totalorder %s92, %s93
    %p105 = scmp.eq.s32.totalorder %s20, 5
    %p106 = por %p104, %p105
    %p108 = scmp.ne.s32.totalorder %s93, %s107
    %p109 = scmp.eq.s32.totalorder %s20, 0
    %p110 = por %p108, %p109
    %s112 = sadd.s32 %s111, 1
    %p115 = scmp.eq.s32.totalorder %s14, 5
    %p116 = scmp.ne.s32.totalorder %s111, %s113
    %p117 = scmp.eq.s32.totalorder %s14, 0
    %p118 = por %p116, %p117
    %p119 = scmp.ne.s32.totalorder %s111, %s113
    %p120 = scmp.eq.s32.totalorder %s19, 5
    %p121 = por %p119, %p120
    %p122 = scmp.ne.s32.totalorder %s113, %s114
    %p123 = scmp.eq.s32.totalorder %s19, 0
    %p124 = por %p122, %p123
    %p125 = scmp.ne.s32.totalorder %s113, %s114
    %p126 = scmp.eq.s32.totalorder %s20, 5
    %p127 = por %p125, %p126
    %p129 = scmp.ne.s32.totalorder %s114, %s128
    %p130 = scmp.eq.s32.totalorder %s20, 0
    %p131 = por %p129, %p130
    %s132 = ssub.s32 %s14, %s21
    %p133 = scmp.eq.s32.totalorder %s132, 0
    %s135 = sadd.s32 %s134, 1
    %s136 = scalar_select %p133, %s134, %s135
    %p139 = pneg %p133
    %p140 = scmp.eq.s32.totalorder %s14, 5
    %p141 = por %p139, %p140
    %p142 = scmp.ne.s32.totalorder %s134, %s137
    %p143 = scmp.eq.s32.totalorder %s14, 0
    %p144 = por %p142, %p143
    %p145 = scmp.ne.s32.totalorder %s134, %s137
    %p146 = scmp.eq.s32.totalorder %s19, 5
    %p147 = por %p145, %p146
    %p148 = scmp.ne.s32.totalorder %s137, %s138
    %p149 = scmp.eq.s32.totalorder %s19, 0
    %p150 = por %p148, %p149
    %p151 = scmp.ne.s32.totalorder %s137, %s138
    %p152 = scmp.eq.s32.totalorder %s20, 5
    %p153 = por %p151, %p152
    %p155 = scmp.ne.s32.totalorder %s138, %s154
    %p156 = scmp.eq.s32.totalorder %s20, 0
    %p157 = por %p155, %p156
    %s158 = ssub.s32 %s14, %s21
    %p159 = scmp.eq.s32.totalorder %s158, 0
    %s161 = sadd.s32 %s160, 1
    %s162 = scalar_select %p159, %s160, %s161
    %p165 = pneg %p159
    %p166 = scmp.eq.s32.totalorder %s14, 5
    %p167 = por %p165, %p166
    %p168 = scmp.ne.s32.totalorder %s160, %s163
    %p169 = scmp.eq.s32.totalorder %s14, 0
    %p170 = por %p168, %p169
    %p171 = scmp.ne.s32.totalorder %s160, %s163
    %p172 = scmp.eq.s32.totalorder %s19, 5
    %p173 = por %p171, %p172
    %p174 = scmp.ne.s32.totalorder %s163, %s164
    %p175 = scmp.eq.s32.totalorder %s19, 0
    %p176 = por %p174, %p175
    %p177 = scmp.ne.s32.totalorder %s163, %s164
    %p178 = scmp.eq.s32.totalorder %s20, 5
    %p179 = por %p177, %p178
    %p181 = scmp.ne.s32.totalorder %s164, %s180
    %p182 = scmp.eq.s32.totalorder %s20, 0
    %p183 = por %p181, %p182
    %s184 = ssub.s32 %s14, %s21
    %p185 = scmp.eq.s32.totalorder %s184, 0
    %s187 = sadd.s32 %s186, 1
    %s188 = scalar_select %p185, %s186, %s187
    %p191 = pneg %p185
    %p192 = scmp.eq.s32.totalorder %s14, 5
    %p193 = por %p191, %p192
    %p194 = scmp.ne.s32.totalorder %s186, %s189
    %p195 = scmp.eq.s32.totalorder %s14, 0
    %p196 = por %p194, %p195
    %p197 = scmp.ne.s32.totalorder %s186, %s189
    %p198 = scmp.eq.s32.totalorder %s19, 5
    %p199 = por %p197, %p198
    %p200 = scmp.ne.s32.totalorder %s189, %s190
    %p201 = scmp.eq.s32.totalorder %s19, 0
    %p202 = por %p200, %p201
    %p203 = scmp.ne.s32.totalorder %s189, %s190
    %p204 = scmp.eq.s32.totalorder %s20, 5
    %p205 = por %p203, %p204
    %p207 = scmp.ne.s32.totalorder %s190, %s206
    %p208 = scmp.eq.s32.totalorder %s20, 0
    %p209 = por %p207, %p208
    %p210 = scmp.le.s32.totalorder 1, %s14
    %p211 = scmp.lt.s32.totalorder %s14, 7
    %p212 = pnand %p210, %p211
    %p213 = pneg %p212
    // Predicated region
    $region9: #{iresidual_xd_forward.4} parent=5 // pred_check
      _
    $region10: #{iresidual_xd_forward.4} parent=5 // pred_check_branch
      %215 = sbr.rel (%p212) target = $region12
    $region11: #{iresidual_xd_forward.4} parent=5 // pred_region
      %s216 = ssub.s32 %s14, 1
      // Predicated region
      $region13: #{iresidual_xd_forward.4} parent=11 // pred_check
        %p217 = pneg %p61
      $region14: #{iresidual_xd_forward.4} parent=11 // pred_check_branch
        %219 = sbr.rel (%p217) target = $region16
      $region15: #{iresidual_xd_forward.4} parent=11 // pred_region
        _
      $region16: #{iresidual_xd_forward.4} parent=11 // pred_fallthru
        _
      // Predicated region
      $region17: #{iresidual_xd_forward.4} parent=11 // pred_check
        %p220 = pneg %p82
      $region18: #{iresidual_xd_forward.4} parent=11 // pred_check_branch
        %222 = sbr.rel (%p220) target = $region20
      $region19: #{iresidual_xd_forward.4} parent=11 // pred_region
        _
      $region20: #{iresidual_xd_forward.4} parent=11 // pred_fallthru
        _
      // Predicated region
      $region21: #{iresidual_xd_forward.4} parent=11 // pred_check
        %p223 = pneg %p103
      $region22: #{iresidual_xd_forward.4} parent=11 // pred_check_branch
        %225 = sbr.rel (%p223) target = $region24
      $region23: #{iresidual_xd_forward.4} parent=11 // pred_region
        _
      $region24: #{iresidual_xd_forward.4} parent=11 // pred_fallthru
        _
      // Predicated region
      $region25: #{iresidual_xd_forward.4} parent=11 // pred_check
        %p226 = pneg %p124
      $region26: #{iresidual_xd_forward.4} parent=11 // pred_check_branch
        %228 = sbr.rel (%p226) target = $region28
      $region27: #{iresidual_xd_forward.4} parent=11 // pred_region
        _
      $region28: #{iresidual_xd_forward.4} parent=11 // pred_fallthru
        _
    $region12: #{iresidual_xd_forward.4} parent=5 // pred_fallthru
      _
    %p229 = scmp.lt.s32.totalorder %s14, 6
    // Predicated region
    $region29: #{iresidual_xd_forward.4} parent=5 // pred_check
      %p230 = pneg %p229
    $region30: #{iresidual_xd_forward.4} parent=5 // pred_check_branch
      %232 = sbr.rel (%p230) target = $region32
    $region31: #{iresidual_xd_forward.4} parent=5 // pred_region
      // Predicated region
      $region33: #{iresidual_xd_forward.4} parent=31 // pred_check
        %p233 = pneg %p34
      $region34: #{iresidual_xd_forward.4} parent=31 // pred_check_branch
        %235 = sbr.rel (%p233) target = $region36
      $region35: #{iresidual_xd_forward.4} parent=31 // pred_region
        %p236 = scmp.lt.s32.totalorder %s14, 5
        %s237 = scalar_select %p236, %s14, 5
        %s238 = smul.addr %s237, 2
        %s239 = smul.addr %s238, 8
        %s240 = scalar_lea.vmem %s0, %s239
      $region36: #{iresidual_xd_forward.4} parent=31 // pred_fallthru
        _
    $region32: #{iresidual_xd_forward.4} parent=5 // pred_fallthru
      _
    %p241 = scmp.le.s32.totalorder 1, %s14
    %p242 = scmp.lt.s32.totalorder %s14, 7
    %p243 = pnand %p241, %p242
    %p244 = pneg %p243
    // Predicated region
    $region37: #{iresidual_xd_forward.4} parent=5 // pred_check
      _
    $region38: #{iresidual_xd_forward.4} parent=5 // pred_check_branch
      %246 = sbr.rel (%p243) target = $region40
    $region39: #{iresidual_xd_forward.4} parent=5 // pred_region
      %s247 = ssub.s32 %s14, 1
      %p248 = scmp.lt.s32.totalorder %s19, 5
      %s249 = scalar_select %p248, %s19, 5
      %s250 = smul.addr %s249, 2
      %s251 = smul.addr %s250, 8
      %s252 = scalar_lea.vmem %s0, %s251
      %p253 = pneg %p40
      %p254 = pneg %p37
      %p255 = pneg %p61
      %p256 = pneg %p58
      %p257 = pneg %p82
      %p258 = pneg %p79
      %p259 = pneg %p103
      %p260 = pneg %p100
      %p261 = pneg %p124
      %p262 = pneg %p121
      %p263 = pneg %p150
      %p264 = pneg %p147
      %p265 = scmp.lt.s32.totalorder %s19, 5
      %s266 = scalar_select %p265, %s19, 5
      %s267 = smul.addr %s266, 2
      %s268 = smul.addr %s267, 8
      %s269 = scalar_lea.vmem %s5, %s268
      %p270 = pneg %p176
      %p271 = pneg %p173
      %p272 = scmp.lt.s32.totalorder %s19, 5
      %s273 = scalar_select %p272, %s19, 5
      %s274 = scalar_lea.vmem %s6, %s273
      %p275 = pneg %p202
      %p276 = pneg %p199
      %p277 = scmp.lt.s32.totalorder %s19, 5
      %s278 = scalar_select %p277, %s19, 5
      %s279 = scalar_lea.vmem %s7, %s278
      %p280 = scmp.lt.s32.totalorder %s19, 5
      %s281 = scalar_select %p280, %s19, 5
      %s282 = smul.addr %s281, 2
      %s283 = smul.addr %s282, 8
      %s284 = scalar_lea.vmem %s0, %s283
      %p285 = scmp.lt.s32.totalorder %s19, 5
      %s286 = scalar_select %p285, %s19, 5
      %s287 = smul.addr %s286, 2
      %s288 = smul.addr %s287, 8
      %s289 = scalar_lea.vmem %s5, %s288
      %p290 = scmp.lt.s32.totalorder %s19, 5
      %s291 = scalar_select %p290, %s19, 5
      %s292 = scalar_lea.vmem %s6, %s291
      %p293 = scmp.lt.s32.totalorder %s19, 5
      %s294 = scalar_select %p293, %s19, 5
      %s295 = scalar_lea.vmem %s7, %s294
      %v296 = vld [vmem:[%s284] sm:$0xff]
      %v297 = vld [vmem:[%s284 + $0x8] sm:$0xff]
      %v298 = vld [vmem:[%s1] sm:$0x1]
      %v300 = vlaneseq
      %v301 = vshrl.u32 %v300, 7
      %v302 = vsub.s32 0, %v301
      %v303 = vrot.slane %v298, %v302
      %v305 = vmul.f32 %v296, %v303
      %v306 = vmul.f32 %v297, %v303
      %v307 = vld [vmem:[%s2] sm:$0x1]
      %v309 = vlaneseq
      %v310 = vshrl.u32 %v309, 7
      %v311 = vsub.s32 0, %v310
      %v312 = vrot.slane %v307, %v311
      %v314 = vadd.f32 %v305, %v312
      %v315 = vadd.f32 %v306, %v312
      %vm316 = vcmp.ge.f32.partialorder %v314, 0.0
      %vm317 = vcmp.ge.f32.partialorder %v315, 0.0
      %v318 = vmul.f32 %v314, 0.01
      %v319 = vmul.f32 %v315, 0.01
      %v320 = vsel %vm316, %v314, %v318
      %v321 = vsel %vm317, %v315, %v319
      %vm322 = vcmask 588800
      %323 = vst.msk [vmem:[#allocation2] sm:$0xff] %vm322, 0.0
      %324 = vst.msk [vmem:[#allocation2 + $0x8] sm:$0xff] %vm322, 0.0
      %vm325 = vcmask 582656
      %326 = vst.msk [vmem:[#allocation2 + $0x10] sm:$0x3] %vm325, 0.0
      %329 = vrot.lane.b32.xlu0 %v320, 4
      %v330 = vpop.permute.xlu0 %329
      %331 = vrot.lane.b32.xlu0 %v321, 4
      %v332 = vpop.permute.xlu0 %331
      %vm335 = vcmask 556064
      %336 = vst.msk [vmem:[#allocation2 + $0x1] sm:$0xff] %vm335, %v330
      %337 = vst.msk [vmem:[#allocation2 + $0x9] sm:$0xff] %vm335, %v332
      %v338 = vld [vmem:[#allocation2] sm:$0xff]
      %v339 = vld [vmem:[#allocation2 + $0x8] sm:$0xff]
      %v340 = vld [vmem:[#allocation2 + $0x10] sm:$0x3]
      %v341 = vld [vmem:[%s3] sm:$0xff]
      %v342 = vld [vmem:[%s3 + $0x8] sm:$0xff]
      %v343 = vld [vmem:[%s3 + $0x10] sm:$0xff]
      %v344 = vld [vmem:[%s3 + $0x18] sm:$0xff]
      %v345 = vld [vmem:[%s3 + $0x20] sm:$0xff]
      %v346 = vld [vmem:[%s3 + $0x28] sm:$0xff]
      %v347 = vld [vmem:[%s3 + $0x30] sm:$0xff]
      %v348 = vld [vmem:[%s3 + $0x38] sm:$0xff]
      %v349 = vld [vmem:[%s3 + $0x40] sm:$0xff]
      %s350 = scalar_lea.vmem %s3, 72
      %v351 = vld [vmem:[%s350] sm:$0xff]
      %v352 = vld [vmem:[%s350 + $0x8] sm:$0xff]
      %v353 = vld [vmem:[%s350 + $0x10] sm:$0xff]
      %v354 = vld [vmem:[%s350 + $0x18] sm:$0xff]
      %v355 = vld [vmem:[%s350 + $0x20] sm:$0xff]
      %v356 = vld [vmem:[%s350 + $0x28] sm:$0xff]
      %v357 = vld [vmem:[%s350 + $0x30] sm:$0xff]
      %v358 = vld [vmem:[%s350 + $0x38] sm:$0xff]
      %v359 = vld [vmem:[%s350 + $0x40] sm:$0xff]
      %vm363 = vcmask 1046528
      %v364 = vrot.slane %v338, 1
      %v365 = vrot.slane %v339, 1
      %v366 = vsel %vm363, %v364, %v365
      %v367 = vrot.slane %v340, 1
      %v368 = vsel %vm363, %v365, %v367
      %v369 = vsel %vm322, %v366, 0
      %v371 = vsel %vm322, %v368, 0
      %373 = vmatprep.subr.mxu0 0.0
      %374 = vmatpush1.msra.mxu0 %v351
      %375 = vmatprep.subr.mxu0 0.0
      %376 = vmatpush1.msra.mxu0 %v352
      %377 = vmatprep.subr.mxu0 0.0
      %378 = vmatpush1.msra.mxu0 %v353
      %379 = vmatprep.subr.mxu0 0.0
      %380 = vmatpush1.msra.mxu0 %v354
      %381 = vmatprep.subr.mxu0 0.0
      %382 = vmatpush1.msra.mxu0 %v355
      %383 = vmatprep.subr.mxu0 0.0
      %384 = vmatpush1.msra.mxu0 %v356
      %385 = vmatprep.subr.mxu0 0.0
      %386 = vmatpush1.msra.mxu0 %v357
      %387 = vmatprep.subr.mxu0 0.0
      %388 = vmatpush1.msra.mxu0 %v358
      %389 = vmatprep.subr.mxu0 0.0
      %390 = vmatpush1.msra.mxu0 %v359
      %391 = vmatprep.subr.mxu0 0.0
      %392 = vmatpush1.msra.mxu0 0.0
      %393 = vmatprep.subr.mxu0 0.0
      %394 = vmatpush1.msra.mxu0 0.0
      %395 = vmatprep.subr.mxu0 0.0
      %396 = vmatpush1.msra.mxu0 0.0
      %397 = vmatprep.subr.mxu0 0.0
      %398 = vmatpush1.msra.mxu0 0.0
      %399 = vmatprep.subr.mxu0 0.0
      %400 = vmatpush1.msra.mxu0 0.0
      %401 = vmatprep.subr.mxu0 0.0
      %402 = vmatpush1.msra.mxu0 0.0
      %403 = vmatprep.subr.mxu0 0.0
      %404 = vmatpush1.msra.mxu0 0.0
      %405 = vmatprep.subr.mxu0 0.0
      %406 = vmatpush1.msra.mxu0 0.0
      %407 = vmatprep.subr.mxu0 0.0
      %408 = vmatpush1.msra.mxu0 0.0
      %409 = vmatprep.subr.mxu0 0.0
      %410 = vmatpush1.msra.mxu0 0.0
      %411 = vmatprep.subr.mxu0 0.0
      %412 = vmatpush1.msra.mxu0 0.0
      %413 = vmatprep.subr.mxu0 0.0
      %414 = vmatpush1.msra.mxu0 0.0
      %415 = vmatprep.subr.mxu0 0.0
      %416 = vmatpush1.msra.mxu0 0.0
      %417 = vmatprep.subr.mxu0 0.0
      %418 = vmatpush1.msra.mxu0 0.0
      %419 = vmatprep.subr.mxu0 0.0
      %420 = vmatpush1.msra.mxu0 0.0
      %421 = vmatprep.subr.mxu0 0.0
      %422 = vmatpush1.msra.mxu0 0.0
      %423 = vmatprep.subr.mxu0 0.0
      %424 = vmatpush1.msra.mxu0 0.0
      %425 = vmatprep.subr.mxu0 0.0
      %426 = vmatpush1.msra.mxu0 0.0
      %427 = vmatprep.subr.mxu0 0.0
      %428 = vmatpush1.msra.mxu0 0.0
      %429 = vmatprep.subr.mxu0 0.0
      %430 = vmatpush1.msra.mxu0 0.0
      %431 = vmatprep.subr.mxu0 0.0
      %432 = vmatpush1.msra.mxu0 0.0
      %433 = vmatprep.subr.mxu0 0.0
      %434 = vmatpush1.msra.mxu0 0.0
      %435 = vmatprep.subr.mxu0 0.0
      %436 = vmatpush1.msra.mxu0 0.0
      %437 = vmatprep.mubr.f32.mxu0 0.0
      %438 = vmatmul.mubr.f32.gmra.mrb[0].mxu0 %v369
      %v439 = vpop.f32.mrb[0].mxu0
      %v440 = vadd.f32 0.0, %v439
      %v441 = vpop.f32.mrb[0].mxu0
      %442 = vmatprep.mubr.f32.mxu0 0.0
      %443 = vmatmul.mubr.f32.gmra.mrb[0].mxu0 %v371
      %v444 = vpop.f32.mrb[0].mxu0
      %v445 = vadd.f32 0.0, %v444
      %v446 = vpop.f32.mrb[0].mxu0
      %447 = vdwg.mxu0
      %v448 = vsel %vm322, %v338, 0
      %v450 = vsel %vm322, %v339, 0
      %452 = vmatprep.subr.mxu0 0.0
      %453 = vmatpush1.msra.mxu0 %v341
      %454 = vmatprep.subr.mxu0 0.0
      %455 = vmatpush1.msra.mxu0 %v342
      %456 = vmatprep.subr.mxu0 0.0
      %457 = vmatpush1.msra.mxu0 %v343
      %458 = vmatprep.subr.mxu0 0.0
      %459 = vmatpush1.msra.mxu0 %v344
      %460 = vmatprep.subr.mxu0 0.0
      %461 = vmatpush1.msra.mxu0 %v345
      %462 = vmatprep.subr.mxu0 0.0
      %463 = vmatpush1.msra.mxu0 %v346
      %464 = vmatprep.subr.mxu0 0.0
      %465 = vmatpush1.msra.mxu0 %v347
      %466 = vmatprep.subr.mxu0 0.0
      %467 = vmatpush1.msra.mxu0 %v348
      %468 = vmatprep.subr.mxu0 0.0
      %469 = vmatpush1.msra.mxu0 %v349
      %470 = vmatprep.subr.mxu0 0.0
      %471 = vmatpush1.msra.mxu0 0.0
      %472 = vmatprep.subr.mxu0 0.0
      %473 = vmatpush1.msra.mxu0 0.0
      %474 = vmatprep.subr.mxu0 0.0
      %475 = vmatpush1.msra.mxu0 0.0
      %476 = vmatprep.subr.mxu0 0.0
      %477 = vmatpush1.msra.mxu0 0.0
      %478 = vmatprep.subr.mxu0 0.0
      %479 = vmatpush1.msra.mxu0 0.0
      %480 = vmatprep.subr.mxu0 0.0
      %481 = vmatpush1.msra.mxu0 0.0
      %482 = vmatprep.subr.mxu0 0.0
      %483 = vmatpush1.msra.mxu0 0.0
      %484 = vmatprep.subr.mxu0 0.0
      %485 = vmatpush1.msra.mxu0 0.0
      %486 = vmatprep.subr.mxu0 0.0
      %487 = vmatpush1.msra.mxu0 0.0
      %488 = vmatprep.subr.mxu0 0.0
      %489 = vmatpush1.msra.mxu0 0.0
      %490 = vmatprep.subr.mxu0 0.0
      %491 = vmatpush1.msra.mxu0 0.0
      %492 = vmatprep.subr.mxu0 0.0
      %493 = vmatpush1.msra.mxu0 0.0
      %494 = vmatprep.subr.mxu0 0.0
      %495 = vmatpush1.msra.mxu0 0.0
      %496 = vmatprep.subr.mxu0 0.0
      %497 = vmatpush1.msra.mxu0 0.0
      %498 = vmatprep.subr.mxu0 0.0
      %499 = vmatpush1.msra.mxu0 0.0
      %500 = vmatprep.subr.mxu0 0.0
      %501 = vmatpush1.msra.mxu0 0.0
      %502 = vmatprep.subr.mxu0 0.0
      %503 = vmatpush1.msra.mxu0 0.0
      %504 = vmatprep.subr.mxu0 0.0
      %505 = vmatpush1.msra.mxu0 0.0
      %506 = vmatprep.subr.mxu0 0.0
      %507 = vmatpush1.msra.mxu0 0.0
      %508 = vmatprep.subr.mxu0 0.0
      %509 = vmatpush1.msra.mxu0 0.0
      %510 = vmatprep.subr.mxu0 0.0
      %511 = vmatpush1.msra.mxu0 0.0
      %512 = vmatprep.subr.mxu0 0.0
      %513 = vmatpush1.msra.mxu0 0.0
      %514 = vmatprep.subr.mxu0 0.0
      %515 = vmatpush1.msra.mxu0 0.0
      %516 = vmatprep.mubr.f32.mxu0 0.0
      %517 = vmatmul.mubr.f32.gmra.mrb[0].mxu0 %v448
      %v518 = vpop.f32.mrb[0].mxu0
      %v519 = vadd.f32 %v440, %v518
      %v520 = vpop.f32.mrb[0].mxu0
      %521 = vmatprep.mubr.f32.mxu0 0.0
      %522 = vmatmul.mubr.f32.gmra.mrb[0].mxu0 %v450
      %v523 = vpop.f32.mrb[0].mxu0
      %v524 = vadd.f32 %v445, %v523
      %v525 = vpop.f32.mrb[0].mxu0
      %526 = vdwg.mxu0
      %s527 = scalar_lea.vmem %s3, 144
      %v528 = vld [vmem:[%s527] sm:$0xff]
      %v529 = vld [vmem:[%s527 + $0x8] sm:$0xff]
      %v530 = vld [vmem:[%s527 + $0x10] sm:$0xff]
      %v531 = vld [vmem:[%s527 + $0x18] sm:$0xff]
      %v532 = vld [vmem:[%s527 + $0x20] sm:$0xff]
      %v533 = vld [vmem:[%s527 + $0x28] sm:$0xff]
      %v534 = vld [vmem:[%s527 + $0x30] sm:$0xff]
      %v535 = vld [vmem:[%s527 + $0x38] sm:$0xff]
      %v536 = vld [vmem:[%s527 + $0x40] sm:$0xff]
      %vm537 = vcmask 1045504
      %v538 = vrot.slane %v338, 2
      %v539 = vrot.slane %v339, 2
      %v540 = vsel %vm537, %v538, %v539
      %v541 = vrot.slane %v340, 2
      %v542 = vsel %vm537, %v539, %v541
      %v543 = vsel %vm322, %v540, 0
      %v545 = vsel %vm322, %v542, 0
      %547 = vmatprep.subr.mxu0 0.0
      %548 = vmatpush1.msra.mxu0 %v528
      %549 = vmatprep.subr.mxu0 0.0
      %550 = vmatpush1.msra.mxu0 %v529
      %551 = vmatprep.subr.mxu0 0.0
      %552 = vmatpush1.msra.mxu0 %v530
      %553 = vmatprep.subr.mxu0 0.0
      %554 = vmatpush1.msra.mxu0 %v531
      %555 = vmatprep.subr.mxu0 0.0
      %556 = vmatpush1.msra.mxu0 %v532
      %557 = vmatprep.subr.mxu0 0.0
      %558 = vmatpush1.msra.mxu0 %v533
      %559 = vmatprep.subr.mxu0 0.0
      %560 = vmatpush1.msra.mxu0 %v534
      %561 = vmatprep.subr.mxu0 0.0
      %562 = vmatpush1.msra.mxu0 %v535
      %563 = vmatprep.subr.mxu0 0.0
      %564 = vmatpush1.msra.mxu0 %v536
      %565 = vmatprep.subr.mxu0 0.0
      %566 = vmatpush1.msra.mxu0 0.0
      %567 = vmatprep.subr.mxu0 0.0
      %568 = vmatpush1.msra.mxu0 0.0
      %569 = vmatprep.subr.mxu0 0.0
      %570 = vmatpush1.msra.mxu0 0.0
      %571 = vmatprep.subr.mxu0 0.0
      %572 = vmatpush1.msra.mxu0 0.0
      %573 = vmatprep.subr.mxu0 0.0
      %574 = vmatpush1.msra.mxu0 0.0
      %575 = vmatprep.subr.mxu0 0.0
      %576 = vmatpush1.msra.mxu0 0.0
      %577 = vmatprep.subr.mxu0 0.0
      %578 = vmatpush1.msra.mxu0 0.0
      %579 = vmatprep.subr.mxu0 0.0
      %580 = vmatpush1.msra.mxu0 0.0
      %581 = vmatprep.subr.mxu0 0.0
      %582 = vmatpush1.msra.mxu0 0.0
      %583 = vmatprep.subr.mxu0 0.0
      %584 = vmatpush1.msra.mxu0 0.0
      %585 = vmatprep.subr.mxu0 0.0
      %586 = vmatpush1.msra.mxu0 0.0
      %587 = vmatprep.subr.mxu0 0.0
      %588 = vmatpush1.msra.mxu0 0.0
      %589 = vmatprep.subr.mxu0 0.0
      %590 = vmatpush1.msra.mxu0 0.0
      %591 = vmatprep.subr.mxu0 0.0
      %592 = vmatpush1.msra.mxu0 0.0
      %593 = vmatprep.subr.mxu0 0.0
      %594 = vmatpush1.msra.mxu0 0.0
      %595 = vmatprep.subr.mxu0 0.0
      %596 = vmatpush1.msra.mxu0 0.0
      %597 = vmatprep.subr.mxu0 0.0
      %598 = vmatpush1.msra.mxu0 0.0
      %599 = vmatprep.subr.mxu0 0.0
      %600 = vmatpush1.msra.mxu0 0.0
      %601 = vmatprep.subr.mxu0 0.0
      %602 = vmatpush1.msra.mxu0 0.0
      %603 = vmatprep.subr.mxu0 0.0
      %604 = vmatpush1.msra.mxu0 0.0
      %605 = vmatprep.subr.mxu0 0.0
      %606 = vmatpush1.msra.mxu0 0.0
      %607 = vmatprep.subr.mxu0 0.0
      %608 = vmatpush1.msra.mxu0 0.0
      %609 = vmatprep.subr.mxu0 0.0
      %610 = vmatpush1.msra.mxu0 0.0
      %611 = vmatprep.mubr.f32.mxu0 0.0
      %612 = vmatmul.mubr.f32.gmra.mrb[0].mxu0 %v543
      %v613 = vpop.f32.mrb[0].mxu0
      %v614 = vadd.f32 0.0, %v613
      %v615 = vpop.f32.mrb[0].mxu0
      %616 = vmatprep.mubr.f32.mxu0 0.0
      %617 = vmatmul.mubr.f32.gmra.mrb[0].mxu0 %v545
      %v618 = vpop.f32.mrb[0].mxu0
      %v619 = vadd.f32 0.0, %v618
      %v620 = vpop.f32.mrb[0].mxu0
      %621 = vdwg.mxu0
      %v622 = vadd.f32 %v519, %v614
      %v623 = vadd.f32 %v524, %v619
      %vm624 = vcmask 523264
      %625 = vst.msk [vmem:[%s289] sm:$0xff] %vm624, %v622
      %626 = vst.msk [vmem:[%s289 + $0x8] sm:$0xff] %vm624, %v623
      %v627 = vld [vmem:[%s4] sm:$0xff]
      %v628 = vld [vmem:[%s4 + $0x8] sm:$0xff]
      %v629 = vld [vmem:[%s4 + $0x10] sm:$0xff]
      %v630 = vld [vmem:[%s4 + $0x18] sm:$0xff]
      %v631 = vld [vmem:[%s4 + $0x20] sm:$0xff]
      %v632 = vld [vmem:[%s4 + $0x28] sm:$0xff]
      %v633 = vld [vmem:[%s4 + $0x30] sm:$0xff]
      %v634 = vld [vmem:[%s4 + $0x38] sm:$0xff]
      %v636 = vsel %vm624, %v622, 0
      %v639 = vsel %vm624, %v623, 0
      %641 = vmatprep.subr.mxu0 0.0
      %642 = vmatpush1.msra.mxu0 %v627
      %643 = vmatprep.subr.mxu0 0.0
      %644 = vmatpush1.msra.mxu0 %v628
      %645 = vmatprep.subr.mxu0 0.0
      %646 = vmatpush1.msra.mxu0 %v629
      %647 = vmatprep.subr.mxu0 0.0
      %648 = vmatpush1.msra.mxu0 %v630
      %649 = vmatprep.subr.mxu0 0.0
      %650 = vmatpush1.msra.mxu0 %v631
      %651 = vmatprep.subr.mxu0 0.0
      %652 = vmatpush1.msra.mxu0 %v632
      %653 = vmatprep.subr.mxu0 0.0
      %654 = vmatpush1.msra.mxu0 %v633
      %655 = vmatprep.subr.mxu0 0.0
      %656 = vmatpush1.msra.mxu0 %v634
      %657 = vmatprep.subr.mxu0 0.0
      %658 = vmatpush1.msra.mxu0 0.0
      %659 = vmatprep.subr.mxu0 0.0
      %660 = vmatpush1.msra.mxu0 0.0
      %661 = vmatprep.subr.mxu0 0.0
      %662 = vmatpush1.msra.mxu0 0.0
      %663 = vmatprep.subr.mxu0 0.0
      %664 = vmatpush1.msra.mxu0 0.0
      %665 = vmatprep.subr.mxu0 0.0
      %666 = vmatpush1.msra.mxu0 0.0
      %667 = vmatprep.subr.mxu0 0.0
      %668 = vmatpush1.msra.mxu0 0.0
      %669 = vmatprep.subr.mxu0 0.0
      %670 = vmatpush1.msra.mxu0 0.0
      %671 = vmatprep.subr.mxu0 0.0
      %672 = vmatpush1.msra.mxu0 0.0
      %673 = vmatprep.subr.mxu0 0.0
      %674 = vmatpush1.msra.mxu0 0.0
      %675 = vmatprep.subr.mxu0 0.0
      %676 = vmatpush1.msra.mxu0 0.0
      %677 = vmatprep.subr.mxu0 0.0
      %678 = vmatpush1.msra.mxu0 0.0
      %679 = vmatprep.subr.mxu0 0.0
      %680 = vmatpush1.msra.mxu0 0.0
      %681 = vmatprep.subr.mxu0 0.0
      %682 = vmatpush1.msra.mxu0 0.0
      %683 = vmatprep.subr.mxu0 0.0
      %684 = vmatpush1.msra.mxu0 0.0
      %685 = vmatprep.subr.mxu0 0.0
      %686 = vmatpush1.msra.mxu0 0.0
      %687 = vmatprep.subr.mxu0 0.0
      %688 = vmatpush1.msra.mxu0 0.0
      %689 = vmatprep.subr.mxu0 0.0
      %690 = vmatpush1.msra.mxu0 0.0
      %691 = vmatprep.subr.mxu0 0.0
      %692 = vmatpush1.msra.mxu0 0.0
      %693 = vmatprep.subr.mxu0 0.0
      %694 = vmatpush1.msra.mxu0 0.0
      %695 = vmatprep.subr.mxu0 0.0
      %696 = vmatpush1.msra.mxu0 0.0
      %697 = vmatprep.subr.mxu0 0.0
      %698 = vmatpush1.msra.mxu0 0.0
      %699 = vmatprep.subr.mxu0 0.0
      %700 = vmatpush1.msra.mxu0 0.0
      %701 = vmatprep.subr.mxu0 0.0
      %702 = vmatpush1.msra.mxu0 0.0
      %703 = vmatprep.subr.mxu0 0.0
      %704 = vmatpush1.msra.mxu0 0.0
      %705 = vmatprep.mubr.f32.mxu0 0.0
      %706 = vmatmul.mubr.f32.gmra.mrb[0].mxu0 %v636
      %v707 = vpop.f32.mrb[0].mxu0
      %v708 = vadd.f32 0.0, %v707
      %v709 = vpop.f32.mrb[0].mxu0
      %710 = vmatprep.mubr.f32.mxu0 0.0
      %711 = vmatmul.mubr.f32.gmra.mrb[0].mxu0 %v639
      %v712 = vpop.f32.mrb[0].mxu0
      %v713 = vadd.f32 0.0, %v712
      %v714 = vpop.f32.mrb[0].mxu0
      %715 = vdwg.mxu0
      %vm716 = vcmask 31744
      %v717 = vsel %vm716, %v708, 0.0
      %v718 = vsel %vm716, %v713, 0.0
      %v719 = vadd.f32 %v717, %v718
      %v720 = vrot.slane %v719, 4
      %v721 = vadd.f32 %v719, %v720
      %v722 = vrot.slane %v721, 2
      %v723 = vadd.f32 %v721, %v722
      %v724 = vrot.slane %v723, 1
      %v725 = vadd.f32 %v723, %v724
      %v726 = vmul.f32 %v622, %v622
      %v727 = vmul.f32 %v623, %v623
      %v729 = vsel %vm624, %v726, 0
      %v732 = vsel %vm624, %v727, 0
      %734 = vmatprep.subr.mxu0 0.0
      %735 = vmatpush1.msra.mxu0 %v627
      %736 = vmatprep.subr.mxu0 0.0
      %737 = vmatpush1.msra.mxu0 %v628
      %738 = vmatprep.subr.mxu0 0.0
      %739 = vmatpush1.msra.mxu0 %v629
      %740 = vmatprep.subr.mxu0 0.0
      %741 = vmatpush1.msra.mxu0 %v630
      %742 = vmatprep.subr.mxu0 0.0
      %743 = vmatpush1.msra.mxu0 %v631
      %744 = vmatprep.subr.mxu0 0.0
      %745 = vmatpush1.msra.mxu0 %v632
      %746 = vmatprep.subr.mxu0 0.0
      %747 = vmatpush1.msra.mxu0 %v633
      %748 = vmatprep.subr.mxu0 0.0
      %749 = vmatpush1.msra.mxu0 %v634
      %750 = vmatprep.subr.mxu0 0.0
      %751 = vmatpush1.msra.mxu0 0.0
      %752 = vmatprep.subr.mxu0 0.0
      %753 = vmatpush1.msra.mxu0 0.0
      %754 = vmatprep.subr.mxu0 0.0
      %755 = vmatpush1.msra.mxu0 0.0
      %756 = vmatprep.subr.mxu0 0.0
      %757 = vmatpush1.msra.mxu0 0.0
      %758 = vmatprep.subr.mxu0 0.0
      %759 = vmatpush1.msra.mxu0 0.0
      %760 = vmatprep.subr.mxu0 0.0
      %761 = vmatpush1.msra.mxu0 0.0
      %762 = vmatprep.subr.mxu0 0.0
      %763 = vmatpush1.msra.mxu0 0.0
      %764 = vmatprep.subr.mxu0 0.0
      %765 = vmatpush1.msra.mxu0 0.0
      %766 = vmatprep.subr.mxu0 0.0
      %767 = vmatpush1.msra.mxu0 0.0
      %768 = vmatprep.subr.mxu0 0.0
      %769 = vmatpush1.msra.mxu0 0.0
      %770 = vmatprep.subr.mxu0 0.0
      %771 = vmatpush1.msra.mxu0 0.0
      %772 = vmatprep.subr.mxu0 0.0
      %773 = vmatpush1.msra.mxu0 0.0
      %774 = vmatprep.subr.mxu0 0.0
      %775 = vmatpush1.msra.mxu0 0.0
      %776 = vmatprep.subr.mxu0 0.0
      %777 = vmatpush1.msra.mxu0 0.0
      %778 = vmatprep.subr.mxu0 0.0
      %779 = vmatpush1.msra.mxu0 0.0
      %780 = vmatprep.subr.mxu0 0.0
      %781 = vmatpush1.msra.mxu0 0.0
      %782 = vmatprep.subr.mxu0 0.0
      %783 = vmatpush1.msra.mxu0 0.0
      %784 = vmatprep.subr.mxu0 0.0
      %785 = vmatpush1.msra.mxu0 0.0
      %786 = vmatprep.subr.mxu0 0.0
      %787 = vmatpush1.msra.mxu0 0.0
      %788 = vmatprep.subr.mxu0 0.0
      %789 = vmatpush1.msra.mxu0 0.0
      %790 = vmatprep.subr.mxu0 0.0
      %791 = vmatpush1.msra.mxu0 0.0
      %792 = vmatprep.subr.mxu0 0.0
      %793 = vmatpush1.msra.mxu0 0.0
      %794 = vmatprep.subr.mxu0 0.0
      %795 = vmatpush1.msra.mxu0 0.0
      %796 = vmatprep.subr.mxu0 0.0
      %797 = vmatpush1.msra.mxu0 0.0
      %798 = vmatprep.mubr.f32.mxu0 0.0
      %799 = vmatmul.mubr.f32.gmra.mrb[0].mxu0 %v729
      %v800 = vpop.f32.mrb[0].mxu0
      %v801 = vadd.f32 0.0, %v800
      %v802 = vpop.f32.mrb[0].mxu0
      %803 = vmatprep.mubr.f32.mxu0 0.0
      %804 = vmatmul.mubr.f32.gmra.mrb[0].mxu0 %v732
      %v805 = vpop.f32.mrb[0].mxu0
      %v806 = vadd.f32 0.0, %v805
      %v807 = vpop.f32.mrb[0].mxu0
      %808 = vdwg.mxu0
      %v809 = vsel %vm716, %v801, 0.0
      %v810 = vsel %vm716, %v806, 0.0
      %v811 = vadd.f32 %v809, %v810
      %v812 = vrot.slane %v811, 4
      %v813 = vadd.f32 %v811, %v812
      %v814 = vrot.slane %v813, 2
      %v815 = vadd.f32 %v813, %v814
      %v816 = vrot.slane %v815, 1
      %v817 = vadd.f32 %v815, %v816
      %vm818 = vcmask 24576
      %819 = vst.msk [vmem:[%s292] sm:$0x1] %vm818, %v725
      %820 = vst.msk [vmem:[%s295] sm:$0x1] %vm818, %v817
      %p821 = scmp.lt.s32.totalorder %s19, 5
      %s822 = scalar_select %p821, %s19, 5
      %s823 = smul.addr %s822, 2
      %s824 = smul.addr %s823, 8
      %s825 = scalar_lea.vmem %s5, %s824
      %p826 = scmp.lt.s32.totalorder %s19, 5
      %s827 = scalar_select %p826, %s19, 5
      %s828 = scalar_lea.vmem %s6, %s827
      %p829 = scmp.lt.s32.totalorder %s19, 5
      %s830 = scalar_select %p829, %s19, 5
      %s831 = scalar_lea.vmem %s7, %s830
      // Predicated region
      $region41: #{iresidual_xd_forward.4} parent=39 // pred_check
        %p832 = pneg %p147
      $region42: #{iresidual_xd_forward.4} parent=39 // pred_check_branch
        %834 = sbr.rel (%p832) target = $region44
      $region43: #{iresidual_xd_forward.4} parent=39 // pred_region
        _
      $region44: #{iresidual_xd_forward.4} parent=39 // pred_fallthru
        _
      // Predicated region
      $region45: #{iresidual_xd_forward.4} parent=39 // pred_check
        %p835 = pneg %p173
      $region46: #{iresidual_xd_forward.4} parent=39 // pred_check_branch
        %837 = sbr.rel (%p835) target = $region48
      $region47: #{iresidual_xd_forward.4} parent=39 // pred_region
        _
      $region48: #{iresidual_xd_forward.4} parent=39 // pred_fallthru
        _
      // Predicated region
      $region49: #{iresidual_xd_forward.4} parent=39 // pred_check
        %p838 = pneg %p199
      $region50: #{iresidual_xd_forward.4} parent=39 // pred_check_branch
        %840 = sbr.rel (%p838) target = $region52
      $region51: #{iresidual_xd_forward.4} parent=39 // pred_region
        _
      $region52: #{iresidual_xd_forward.4} parent=39 // pred_fallthru
        _
    $region40: #{iresidual_xd_forward.4} parent=5 // pred_fallthru
      _
    %p841 = scmp.le.s32.totalorder 2, %s14
    // Predicated region
    $region53: #{iresidual_xd_forward.4} parent=5 // pred_check
      %p842 = pneg %p841
    $region54: #{iresidual_xd_forward.4} parent=5 // pred_check_branch
      %844 = sbr.rel (%p842) target = $region56
    $region55: #{iresidual_xd_forward.4} parent=5 // pred_region
      %s845 = ssub.s32 %s14, 2
      // Predicated region
      $region57: #{iresidual_xd_forward.4} parent=55 // pred_check
        %p846 = pneg %p153
      $region58: #{iresidual_xd_forward.4} parent=55 // pred_check_branch
        %848 = sbr.rel (%p846) target = $region60
      $region59: #{iresidual_xd_forward.4} parent=55 // pred_region
        %p849 = scmp.lt.s32.totalorder %s20, 5
        %s850 = scalar_select %p849, %s20, 5
        %s851 = smul.addr %s850, 2
        %s852 = smul.addr %s851, 8
        %s853 = scalar_lea.vmem %s5, %s852
      $region60: #{iresidual_xd_forward.4} parent=55 // pred_fallthru
        _
      // Predicated region
      $region61: #{iresidual_xd_forward.4} parent=55 // pred_check
        %p854 = pneg %p179
      $region62: #{iresidual_xd_forward.4} parent=55 // pred_check_branch
        %856 = sbr.rel (%p854) target = $region64
      $region63: #{iresidual_xd_forward.4} parent=55 // pred_region
        %p857 = scmp.lt.s32.totalorder %s20, 5
        %s858 = scalar_select %p857, %s20, 5
        %s859 = scalar_lea.vmem %s6, %s858
      $region64: #{iresidual_xd_forward.4} parent=55 // pred_fallthru
        _
      // Predicated region
      $region65: #{iresidual_xd_forward.4} parent=55 // pred_check
        %p860 = pneg %p205
      $region66: #{iresidual_xd_forward.4} parent=55 // pred_check_branch
        %862 = sbr.rel (%p860) target = $region68
      $region67: #{iresidual_xd_forward.4} parent=55 // pred_region
        %p863 = scmp.lt.s32.totalorder %s20, 5
        %s864 = scalar_select %p863, %s20, 5
        %s865 = scalar_lea.vmem %s7, %s864
      $region68: #{iresidual_xd_forward.4} parent=55 // pred_fallthru
        _
    $region56: #{iresidual_xd_forward.4} parent=5 // pred_fallthru
      _
  $region6: #{iresidual_xd_forward.4} parent=0 // loop_footer
    %s18 = sadd.s32 1, %s14
  $region7: #{iresidual_xd_forward.4} parent=0 // loop_footer_branch
    %13 = sbr.rel target = $region3
  $region8: #{iresidual_xd_forward.4} parent=0 // loop_exit
    _

// kernel: iresidual_xd_forward.5
$region0: #{iresidual_xd_forward.5}
  #allocation0 [shape = 'u32[]', space=smem, size = 0x4, offset = 0x4, fixed_abs, tag = 'smem constant byte address 0x4 - core index']
  #allocation1 [shape = 'u32[144,128]{1,0:T(1,128)}', space=vmem, size = 0x12000, scoped, tag = 'internal scratch']
  %s0 = inlined_call_operand.vmem [shape: f32[6,16,64], index: 0, kind: input, shape index: {}]
  %s1 = inlined_call_operand.vmem [shape: f32[1,64], index: 1, kind: input, shape index: {}]
  %s2 = inlined_call_operand.vmem [shape: f32[1,64], index: 2, kind: input, shape index: {}]
  %s3 = inlined_call_operand.vmem [shape: f32[6,16,64], index: 3, kind: input, shape index: {}]
  %s4 = inlined_call_operand.vmem [shape: f32[6,16,64], index: 4, kind: output, shape index: {}]
  %s5 = sld [smem:[#allocation0]]
  $region49: #{iresidual_xd_forward.5} parent=0
    _
  %s7 = ssub.s32 1, %s5
  %s8 = scalar_select 0, %s7, %s5
  loop: start=0, step=1, limit=8
  $region2: #{iresidual_xd_forward.5} parent=0 // loop_pre_header
    _
  $region3: #{iresidual_xd_forward.5} parent=0 // loop_header
    %s10 = sphi 0, %s14
    %p11 = scmp.ge.s32.totalorder %s10, 8
    %s20 = sphi 0, %s22
    %s23 = sphi 0, %s20
    %s24 = sphi 0, %s23
    %s40 = sphi 0, %s24
    %s44 = sphi 0, %s44
    %s46 = sphi 0, %s44
    %s47 = sphi 0, %s46
    %s61 = sphi 0, %s47
    %s65 = sphi 0, %s65
    %s67 = sphi 0, %s65
    %s68 = sphi 0, %s67
    %s82 = sphi 0, %s68
    %s88 = sphi 0, %s90
    %s91 = sphi 0, %s88
    %s92 = sphi 0, %s91
    %s108 = sphi 0, %s92
    %s114 = sphi 0, %s116
    %s117 = sphi 0, %s114
    %s118 = sphi 0, %s117
    %s134 = sphi 0, %s118
  $region4: #{iresidual_xd_forward.5} parent=0 // loop_header_branch
    %13 = sbr.rel (%p11) target = $region8
  $region5: #{iresidual_xd_forward.5} parent=0 // loop_body
    %s15 = ssub.s32 %s10, 1
    %s16 = ssub.s32 %s10, 2
    %s17 = sadd.s32 %s10, 1
    %s18 = ssub.s32 %s10, %s17
    %p19 = scmp.eq.s32.totalorder %s18, 0
    %s21 = sadd.s32 %s20, 1
    %s22 = scalar_select %p19, %s20, %s21
    %p25 = pneg %p19
    %p26 = scmp.eq.s32.totalorder %s10, 5
    %p27 = por %p25, %p26
    %p28 = scmp.ne.s32.totalorder %s20, %s23
    %p29 = scmp.eq.s32.totalorder %s10, 0
    %p30 = por %p28, %p29
    %p31 = scmp.ne.s32.totalorder %s20, %s23
    %p32 = scmp.eq.s32.totalorder %s15, 5
    %p33 = por %p31, %p32
    %p34 = scmp.ne.s32.totalorder %s23, %s24
    %p35 = scmp.eq.s32.totalorder %s15, 0
    %p36 = por %p34, %p35
    %p37 = scmp.ne.s32.totalorder %s23, %s24
    %p38 = scmp.eq.s32.totalorder %s16, 5
    %p39 = por %p37, %p38
    %p41 = scmp.ne.s32.totalorder %s24, %s40
    %p42 = scmp.eq.s32.totalorder %s16, 0
    %p43 = por %p41, %p42
    %s45 = sadd.s32 %s44, 1
    %p48 = scmp.eq.s32.totalorder %s10, 5
    %p49 = scmp.ne.s32.totalorder %s44, %s46
    %p50 = scmp.eq.s32.totalorder %s10, 0
    %p51 = por %p49, %p50
    %p52 = scmp.ne.s32.totalorder %s44, %s46
    %p53 = scmp.eq.s32.totalorder %s15, 5
    %p54 = por %p52, %p53
    %p55 = scmp.ne.s32.totalorder %s46, %s47
    %p56 = scmp.eq.s32.totalorder %s15, 0
    %p57 = por %p55, %p56
    %p58 = scmp.ne.s32.totalorder %s46, %s47
    %p59 = scmp.eq.s32.totalorder %s16, 5
    %p60 = por %p58, %p59
    %p62 = scmp.ne.s32.totalorder %s47, %s61
    %p63 = scmp.eq.s32.totalorder %s16, 0
    %p64 = por %p62, %p63
    %s66 = sadd.s32 %s65, 1
    %p69 = scmp.eq.s32.totalorder %s10, 5
    %p70 = scmp.ne.s32.totalorder %s65, %s67
    %p71 = scmp.eq.s32.totalorder %s10, 0
    %p72 = por %p70, %p71
    %p73 = scmp.ne.s32.totalorder %s65, %s67
    %p74 = scmp.eq.s32.totalorder %s15, 5
    %p75 = por %p73, %p74
    %p76 = scmp.ne.s32.totalorder %s67, %s68
    %p77 = scmp.eq.s32.totalorder %s15, 0
    %p78 = por %p76, %p77
    %p79 = scmp.ne.s32.totalorder %s67, %s68
    %p80 = scmp.eq.s32.totalorder %s16, 5
    %p81 = por %p79, %p80
    %p83 = scmp.ne.s32.totalorder %s68, %s82
    %p84 = scmp.eq.s32.totalorder %s16, 0
    %p85 = por %p83, %p84
    %s86 = ssub.s32 %s10, %s17
    %p87 = scmp.eq.s32.totalorder %s86, 0
    %s89 = sadd.s32 %s88, 1
    %s90 = scalar_select %p87, %s88, %s89
    %p93 = pneg %p87
    %p94 = scmp.eq.s32.totalorder %s10, 5
    %p95 = por %p93, %p94
    %p96 = scmp.ne.s32.totalorder %s88, %s91
    %p97 = scmp.eq.s32.totalorder %s10, 0
    %p98 = por %p96, %p97
    %p99 = scmp.ne.s32.totalorder %s88, %s91
    %p100 = scmp.eq.s32.totalorder %s15, 5
    %p101 = por %p99, %p100
    %p102 = scmp.ne.s32.totalorder %s91, %s92
    %p103 = scmp.eq.s32.totalorder %s15, 0
    %p104 = por %p102, %p103
    %p105 = scmp.ne.s32.totalorder %s91, %s92
    %p106 = scmp.eq.s32.totalorder %s16, 5
    %p107 = por %p105, %p106
    %p109 = scmp.ne.s32.totalorder %s92, %s108
    %p110 = scmp.eq.s32.totalorder %s16, 0
    %p111 = por %p109, %p110
    %s112 = ssub.s32 %s10, %s17
    %p113 = scmp.eq.s32.totalorder %s112, 0
    %s115 = sadd.s32 %s114, 1
    %s116 = scalar_select %p113, %s114, %s115
    %p119 = pneg %p113
    %p120 = scmp.eq.s32.totalorder %s10, 5
    %p121 = por %p119, %p120
    %p122 = scmp.ne.s32.totalorder %s114, %s117
    %p123 = scmp.eq.s32.totalorder %s10, 0
    %p124 = por %p122, %p123
    %p125 = scmp.ne.s32.totalorder %s114, %s117
    %p126 = scmp.eq.s32.totalorder %s15, 5
    %p127 = por %p125, %p126
    %p128 = scmp.ne.s32.totalorder %s117, %s118
    %p129 = scmp.eq.s32.totalorder %s15, 0
    %p130 = por %p128, %p129
    %p131 = scmp.ne.s32.totalorder %s117, %s118
    %p132 = scmp.eq.s32.totalorder %s16, 5
    %p133 = por %p131, %p132
    %p135 = scmp.ne.s32.totalorder %s118, %s134
    %p136 = scmp.eq.s32.totalorder %s16, 0
    %p137 = por %p135, %p136
    %p138 = scmp.le.s32.totalorder 1, %s10
    %p139 = scmp.lt.s32.totalorder %s10, 7
    %p140 = pnand %p138, %p139
    %p141 = pneg %p140
    // Predicated region
    $region9: #{iresidual_xd_forward.5} parent=5 // pred_check
      _
    $region10: #{iresidual_xd_forward.5} parent=5 // pred_check_branch
      %143 = sbr.rel (%p140) target = $region12
    $region11: #{iresidual_xd_forward.5} parent=5 // pred_region
      %s144 = ssub.s32 %s10, 1
      // Predicated region
      $region13: #{iresidual_xd_forward.5} parent=11 // pred_check
        %p145 = pneg %p57
      $region14: #{iresidual_xd_forward.5} parent=11 // pred_check_branch
        %147 = sbr.rel (%p145) target = $region16
      $region15: #{iresidual_xd_forward.5} parent=11 // pred_region
        _
      $region16: #{iresidual_xd_forward.5} parent=11 // pred_fallthru
        _
      // Predicated region
      $region17: #{iresidual_xd_forward.5} parent=11 // pred_check
        %p148 = pneg %p78
      $region18: #{iresidual_xd_forward.5} parent=11 // pred_check_branch
        %150 = sbr.rel (%p148) target = $region20
      $region19: #{iresidual_xd_forward.5} parent=11 // pred_region
        _
      $region20: #{iresidual_xd_forward.5} parent=11 // pred_fallthru
        _
    $region12: #{iresidual_xd_forward.5} parent=5 // pred_fallthru
      _
    %p151 = scmp.lt.s32.totalorder %s10, 6
    // Predicated region
    $region21: #{iresidual_xd_forward.5} parent=5 // pred_check
      %p152 = pneg %p151
    $region22: #{iresidual_xd_forward.5} parent=5 // pred_check_branch
      %154 = sbr.rel (%p152) target = $region24
    $region23: #{iresidual_xd_forward.5} parent=5 // pred_region
      // Predicated region
      $region25: #{iresidual_xd_forward.5} parent=23 // pred_check
        %p155 = pneg %p30
      $region26: #{iresidual_xd_forward.5} parent=23 // pred_check_branch
        %157 = sbr.rel (%p155) target = $region28
      $region27: #{iresidual_xd_forward.5} parent=23 // pred_region
        %p158 = scmp.lt.s32.totalorder %s10, 5
        %s159 = scalar_select %p158, %s10, 5
        %s160 = smul.addr %s159, 2
        %s161 = smul.addr %s160, 8
        %s162 = scalar_lea.vmem %s0, %s161
      $region28: #{iresidual_xd_forward.5} parent=23 // pred_fallthru
        _
      // Predicated region
      $region29: #{iresidual_xd_forward.5} parent=23 // pred_check
        %p163 = pneg %p98
      $region30: #{iresidual_xd_forward.5} parent=23 // pred_check_branch
        %165 = sbr.rel (%p163) target = $region32
      $region31: #{iresidual_xd_forward.5} parent=23 // pred_region
        %p166 = scmp.lt.s32.totalorder %s10, 5
        %s167 = scalar_select %p166, %s10, 5
        %s168 = smul.addr %s167, 2
        %s169 = smul.addr %s168, 8
        %s170 = scalar_lea.vmem %s3, %s169
      $region32: #{iresidual_xd_forward.5} parent=23 // pred_fallthru
        _
    $region24: #{iresidual_xd_forward.5} parent=5 // pred_fallthru
      _
    %p171 = scmp.le.s32.totalorder 1, %s10
    %p172 = scmp.lt.s32.totalorder %s10, 7
    %p173 = pnand %p171, %p172
    %p174 = pneg %p173
    // Predicated region
    $region33: #{iresidual_xd_forward.5} parent=5 // pred_check
      _
    $region34: #{iresidual_xd_forward.5} parent=5 // pred_check_branch
      %176 = sbr.rel (%p173) target = $region36
    $region35: #{iresidual_xd_forward.5} parent=5 // pred_region
      %s177 = ssub.s32 %s10, 1
      %p178 = scmp.lt.s32.totalorder %s15, 5
      %s179 = scalar_select %p178, %s15, 5
      %s180 = smul.addr %s179, 2
      %s181 = smul.addr %s180, 8
      %s182 = scalar_lea.vmem %s0, %s181
      %p183 = pneg %p36
      %p184 = pneg %p33
      %p185 = pneg %p57
      %p186 = pneg %p54
      %p187 = pneg %p78
      %p188 = pneg %p75
      %p189 = scmp.lt.s32.totalorder %s15, 5
      %s190 = scalar_select %p189, %s15, 5
      %s191 = smul.addr %s190, 2
      %s192 = smul.addr %s191, 8
      %s193 = scalar_lea.vmem %s3, %s192
      %p194 = pneg %p104
      %p195 = pneg %p101
      %p196 = pneg %p130
      %p197 = pneg %p127
      %p198 = scmp.lt.s32.totalorder %s15, 5
      %s199 = scalar_select %p198, %s15, 5
      %s200 = smul.addr %s199, 2
      %s201 = smul.addr %s200, 8
      %s202 = scalar_lea.vmem %s4, %s201
      %p203 = scmp.lt.s32.totalorder %s15, 5
      %s204 = scalar_select %p203, %s15, 5
      %s205 = smul.addr %s204, 2
      %s206 = smul.addr %s205, 8
      %s207 = scalar_lea.vmem %s0, %s206
      %p208 = scmp.lt.s32.totalorder %s15, 5
      %s209 = scalar_select %p208, %s15, 5
      %s210 = smul.addr %s209, 2
      %s211 = smul.addr %s210, 8
      %s212 = scalar_lea.vmem %s3, %s211
      %p213 = scmp.lt.s32.totalorder %s15, 5
      %s214 = scalar_select %p213, %s15, 5
      %s215 = smul.addr %s214, 2
      %s216 = smul.addr %s215, 8
      %s217 = scalar_lea.vmem %s4, %s216
      %v218 = vld [vmem:[%s207] sm:$0xff]
      %v219 = vld [vmem:[%s207 + $0x8] sm:$0xff]
      %v220 = vld [vmem:[%s1] sm:$0x1]
      %v222 = vlaneseq
      %v223 = vshrl.u32 %v222, 7
      %v224 = vsub.s32 0, %v223
      %v225 = vrot.slane %v220, %v224
      %v227 = vmul.f32 %v218, %v225
      %v228 = vmul.f32 %v219, %v225
      %v229 = vld [vmem:[%s2] sm:$0x1]
      %v231 = vlaneseq
      %v232 = vshrl.u32 %v231, 7
      %v233 = vsub.s32 0, %v232
      %v234 = vrot.slane %v229, %v233
      %v236 = vadd.f32 %v227, %v234
      %v237 = vadd.f32 %v228, %v234
      %vm238 = vcmp.ge.f32.partialorder %v236, 0.0
      %vm239 = vcmp.ge.f32.partialorder %v237, 0.0
      %v240 = vmul.f32 %v236, 0.01
      %v241 = vmul.f32 %v237, 0.01
      %v242 = vsel %vm238, %v236, %v240
      %v243 = vsel %vm239, %v237, %v241
      %v244 = vld [vmem:[%s212] sm:$0xff]
      %v245 = vld [vmem:[%s212 + $0x8] sm:$0xff]
      %v246 = vadd.f32 %v242, %v244
      %v247 = vadd.f32 %v243, %v245
      %vm248 = vcmask 523264
      %249 = vst.msk [vmem:[%s217] sm:$0xff] %vm248, %v246
      %250 = vst.msk [vmem:[%s217 + $0x8] sm:$0xff] %vm248, %v247
      %p251 = scmp.lt.s32.totalorder %s15, 5
      %s252 = scalar_select %p251, %s15, 5
      %s253 = smul.addr %s252, 2
      %s254 = smul.addr %s253, 8
      %s255 = scalar_lea.vmem %s4, %s254
      // Predicated region
      $region37: #{iresidual_xd_forward.5} parent=35 // pred_check
        %p256 = pneg %p127
      $region38: #{iresidual_xd_forward.5} parent=35 // pred_check_branch
        %258 = sbr.rel (%p256) target = $region40
      $region39: #{iresidual_xd_forward.5} parent=35 // pred_region
        _
      $region40: #{iresidual_xd_forward.5} parent=35 // pred_fallthru
        _
    $region36: #{iresidual_xd_forward.5} parent=5 // pred_fallthru
      _
    %p259 = scmp.le.s32.totalorder 2, %s10
    // Predicated region
    $region41: #{iresidual_xd_forward.5} parent=5 // pred_check
      %p260 = pneg %p259
    $region42: #{iresidual_xd_forward.5} parent=5 // pred_check_branch
      %262 = sbr.rel (%p260) target = $region44
    $region43: #{iresidual_xd_forward.5} parent=5 // pred_region
      %s263 = ssub.s32 %s10, 2
      // Predicated region
      $region45: #{iresidual_xd_forward.5} parent=43 // pred_check
        %p264 = pneg %p133
      $region46: #{iresidual_xd_forward.5} parent=43 // pred_check_branch
        %266 = sbr.rel (%p264) target = $region48
      $region47: #{iresidual_xd_forward.5} parent=43 // pred_region
        %p267 = scmp.lt.s32.totalorder %s16, 5
        %s268 = scalar_select %p267, %s16, 5
        %s269 = smul.addr %s268, 2
        %s270 = smul.addr %s269, 8
        %s271 = scalar_lea.vmem %s4, %s270
      $region48: #{iresidual_xd_forward.5} parent=43 // pred_fallthru
        _
    $region44: #{iresidual_xd_forward.5} parent=5 // pred_fallthru
      _
  $region6: #{iresidual_xd_forward.5} parent=0 // loop_footer
    %s14 = sadd.s32 1, %s10
  $region7: #{iresidual_xd_forward.5} parent=0 // loop_footer_branch
    %9 = sbr.rel target = $region3
  $region8: #{iresidual_xd_forward.5} parent=0 // loop_exit
    _

</llo_original>
